<compile_context>
chip_gen: v7x
topology: tpu7x:2x2x1
jax: 0.10.0
libtpu: 0.0.40
codegen_flags: <defaults>
</compile_context>

<pallas_src>
import functools

import jax
import jax.numpy as jnp
from jax import lax
from jax.experimental import pallas as pl
from jax.experimental.pallas import tpu as pltpu


def _cdiv(a, b):
    return -(-a // b)


def _sigmoid(x):
    # Exact sigmoid as a single EUP pass: sigma(x) = 0.5*(tanh(x/2)+1).
    return 0.5 * jnp.tanh(0.5 * x) + 0.5


def _update_net_kernel(tok_ref, w_ref, b_ref, r_ref, diag_ref, ek_ref, ev_ref,
                       out_ref, proj_scr, *, N, D, H, bt):
    """One grid step: `bt` batches.

    tok_ref : (bt*N, D)      tokens (batch folded into rows)
    w_ref   : (D, Wpad)      fused [w_k | w_v | w_kh | w_vh | 0-pad]
    b_ref   : (1, Wpad)      fused bias
    r_ref   : (N, N*H)       0/1: lane i*H+j  <- token i        (repeat x H)
    diag_ref: (H, N*H)       0/1: lane i*H+j  <- row j%H        (diag select)
    ek_ref  : (H, H*H)       0/1: lane h*H+e  <- row h          (k expansion)
    ev_ref  : (H, H*H)       0/1: lane h*H+e  <- row e          (v expansion)
    out_ref : (bt, D, H*H)   lane-dense weight matrix (transposed w.r.t. the
                             PyTorch output; fixed in the wrapper)
    proj_scr: (bt*N, Wpad)   VMEM scratch for the hoisted projection
    """
    HH = H * H

    # ---- hoisted projection: ONE MXU matmul per grid step --------------
    proj_scr[...] = (
        jnp.dot(tok_ref[...], w_ref[...], preferred_element_type=jnp.float32)
        + b_ref[...])

    r16 = r_ref[...]
    diag = diag_ref[...]
    e1k = ek_ref[...]
    e1v = ev_ref[...]

    def body(b, carry):
        start = pl.multiple_of(b * N, N)
        proj_b = proj_scr[pl.ds(start, N), :]          # (N, Wpad)
        proj_t = jnp.transpose(proj_b)                 # (Wpad, N)  (idle XLU)

        # allx[j, i*H+m] = proj[i, j]  for j in [0, 2H+2D)
        allx = jnp.dot(proj_t[:2 * H + 2 * D], r16,
                       preferred_element_type=jnp.float32)   # (2H+2D, N*H)

        # compact per-token projections on lanes (i*H + feature):
        kflat = jnp.sum(allx[0:H] * diag, axis=0, keepdims=True)       # k[i,h]
        vflat = jnp.sum(allx[H:2 * H] * diag, axis=0, keepdims=True)   # v[i,e]
        kh = allx[2 * H:2 * H + D]                                     # k_h[i,c]
        vh = allx[2 * H + D:2 * H + 2 * D]                             # v_h[i,c]

        # compact silu: sigmoid runs on 2 x (D, N*H) = 8 f32 vregs / batch
        pk = kh * kflat
        pv = vh * vflat
        lk = pk * _sigmoid(pk)     # silu(k[i,h]*k_h[i,c]) at [c, i*H+h]
        lv = pv * _sigmoid(pv)     # silu(v[i,e]*v_h[i,c]) at [c, i*H+e]

        # per-token MXU expansion to the lane-dense (D, H*H) layout,
        # VPU multiply + accumulate with two partial accumulators.
        acc0 = jnp.zeros((D, HH), jnp.float32)
        acc1 = jnp.zeros((D, HH), jnp.float32)
        for t in range(N):                                  # static unroll
            lkt = lk[:, t * H:(t + 1) * H]                  # (D, H)
            lvt = lv[:, t * H:(t + 1) * H]                  # (D, H)
            ek = jnp.dot(lkt, e1k, preferred_element_type=jnp.float32)  # (D,HH)
            ev = jnp.dot(lvt, e1v, preferred_element_type=jnp.float32)  # (D,HH)
            contrib = ek * ev
            if t % 2 == 0:
                acc0 = acc0 + contrib
            else:
                acc1 = acc1 + contrib

        out_ref[b] = (acc0 + acc1).astype(out_ref.dtype)
        return carry

    lax.fori_loop(0, bt, body, 0)


def prepare_update_net_v2_params(w_kv, b_kv, w_kvh, b_kvh, *, num_h_patch,
                                 seq_len):
    """One-time parameter / constant re-layout (hoisted out of the call path)."""
    D = w_kv.shape[0]
    H = num_h_patch
    N = seq_len
    HH = H * H
    assert w_kv.shape == (D, 2 * H)
    assert w_kvh.shape == (D, 2 * D)
    b_kv = jnp.reshape(b_kv, (2 * H,)).astype(jnp.float32)
    b_kvh = jnp.reshape(b_kvh, (2 * D,)).astype(jnp.float32)

    # fused projection weight / bias, padded to a 128-lane multiple
    width = 2 * H + 2 * D
    wpad = _cdiv(width, 128) * 128
    w_cat = jnp.zeros((D, wpad), jnp.float32)
    w_cat = w_cat.at[:, :2 * H].set(w_kv.astype(jnp.float32))
    w_cat = w_cat.at[:, 2 * H:width].set(w_kvh.astype(jnp.float32))
    b_cat = jnp.zeros((1, wpad), jnp.float32)
    b_cat = b_cat.at[0, :2 * H].set(b_kv)
    b_cat = b_cat.at[0, 2 * H:width].set(b_kvh)

    # constant 0/1 matrices fed to the MXU inside the kernel
    lane = jnp.arange(N * H)
    r16 = (lane[None, :] // H == jnp.arange(N)[:, None]).astype(jnp.float32)
    diag = (lane[None, :] % H == jnp.arange(H)[:, None]).astype(jnp.float32)
    lane2 = jnp.arange(HH)
    e1k = (jnp.arange(H)[:, None] == (lane2 // H)[None, :]).astype(jnp.float32)
    e1v = (jnp.arange(H)[:, None] == (lane2 % H)[None, :]).astype(jnp.float32)

    return dict(w_cat=w_cat, b_cat=b_cat, r16=r16, diag=diag, e1k=e1k, e1v=e1v,
                D=D, H=H, N=N, wpad=wpad)


def _num_tensorcores_per_chip():
    try:
        kind = jax.devices()[0].device_kind.lower()
    except Exception:
        return 1
    # v7x has 2 TensorCores per chip; v5e / v6e have one.
    return 2 if "v7" in kind else 1


def update_net_v2_additive(token, params, *, transpose_output=True):
    """token: (B, N, D) f32.  Returns (B, num_h_patch**2, D) f32."""
    D, H, N, wpad = params["D"], params["H"], params["N"], params["wpad"]
    HH = H * H
    B, n, d = token.shape
    assert n == N and d == D

    # ---- generation-aware grid / batch-tile selection -------------------
    num_tc = _num_tensorcores_per_chip()
    steps = 2 if (num_tc >= 2 and B >= 2) else 1
    bt = _cdiv(B, steps)

    # real double-buffered block footprint per batch + per-step scratch
    per_batch = 2 * (N * D + D * HH) * 4 + N * wpad * 4
    const_bytes = 2 * 4 * (D * wpad + wpad + N * N * H + H * N * H + 2 * H * HH)
    budget = 24 * 1024 * 1024
    max_bt = max(1, (budget - const_bytes) // per_batch)
    if bt > max_bt:
        steps = _cdiv(B, max_bt)
        bt = _cdiv(B, steps)
    Bp = steps * bt

    tok = token.astype(jnp.float32)
    if Bp != B:            # pad awkward B instead of degrading to bt=1
        tok = jnp.pad(tok, ((0, Bp - B), (0, 0), (0, 0)))
    tok2 = tok.reshape(Bp * N, D)

    vmem_limit = int(min(48 * 1024 * 1024,
                         const_bytes + per_batch * bt + 4 * 1024 * 1024))

    kernel = functools.partial(_update_net_kernel, N=N, D=D, H=H, bt=bt)

    wm = pl.pallas_call(
        kernel,
        out_shape=jax.ShapeDtypeStruct((Bp, D, HH), jnp.float32),
        grid_spec=pltpu.PrefetchScalarGridSpec(
            num_scalar_prefetch=0,
            grid=(steps,),
            in_specs=[
                pl.BlockSpec((bt * N, D), lambda s: (s, 0)),
                pl.BlockSpec((D, wpad), lambda s: (0, 0)),
                pl.BlockSpec((1, wpad), lambda s: (0, 0)),
                pl.BlockSpec((N, N * H), lambda s: (0, 0)),
                pl.BlockSpec((H, N * H), lambda s: (0, 0)),
                pl.BlockSpec((H, HH), lambda s: (0, 0)),
                pl.BlockSpec((H, HH), lambda s: (0, 0)),
            ],
            out_specs=pl.BlockSpec((bt, D, HH), lambda s: (s, 0, 0)),
            scratch_shapes=[pltpu.VMEM((bt * N, wpad), jnp.float32)],
        ),
        compiler_params=pltpu.CompilerParams(
            dimension_semantics=("parallel",),
            vmem_limit_bytes=vmem_limit,
        ),
    )(tok2, params["w_cat"], params["b_cat"], params["r16"], params["diag"],
      params["e1k"], params["e1v"])

    wm = wm[:B]
    if transpose_output:
        # PyTorch layout is (B, H*H, D); consumers that can take the
        # lane-dense (B, D, H*H) layout may pass transpose_output=False.
        wm = jnp.transpose(wm, (0, 2, 1))
    return wm


# ---------------------------- reference & demo ------------------------------

def _silu(x):
    return x * jax.nn.sigmoid(x)


def _reference(token, w_kv, b_kv, w_kvh, b_kvh, *, num_h_patch):
    H = num_h_patch
    B, N, D = token.shape
    kv = token @ w_kv + b_kv
    kvh = token @ w_kvh + b_kvh
    k, v = kv[..., :H], kv[..., H:]
    k_h, v_h = kvh[..., :D], kvh[..., D:]
    k4 = _silu(jnp.einsum('bnd,bnh->bhnd', k, k_h))
    v4 = _silu(jnp.einsum('bnd,bnh->bhnd', v, v_h))
    wm = jnp.einsum('bhnd,bhne->bdeh', k4, v4)
    return wm.reshape(B, H * H, D)


if __name__ == "__main__":
    # cfg: num_h_patch=16, hidden_channels=32, bias=True, type='additive',
    #      act='silu', use_conv=False;  token seq length N=8, batch B=2.
    B, N, D, H = 2, 8, 32, 16

    key = jax.random.PRNGKey(0)
    k0, k1, k2, k3, k4 = jax.random.split(key, 5)

    token = jax.random.normal(k0, (B, N, D), dtype=jnp.float32)
    # Deterministic parameter init (Linear weights stored as (in, out)).
    w_kv = jax.random.normal(k1, (D, 2 * H), dtype=jnp.float32) * 0.1
    b_kv = jax.random.normal(k2, (2 * H,), dtype=jnp.float32) * 0.05
    w_kvh = jax.random.normal(k3, (D, 2 * D), dtype=jnp.float32) * 0.1
    b_kvh = jax.random.normal(k4, (2 * D,), dtype=jnp.float32) * 0.05

    params = prepare_update_net_v2_params(w_kv, b_kv, w_kvh, b_kvh,
                                          num_h_patch=H, seq_len=N)

    out = update_net_v2_additive(token, params)
    out = jax.block_until_ready(out)

    ref = _reference(token, w_kv, b_kv, w_kvh, b_kvh, num_h_patch=H)
    assert out.shape == (B, H * H, D)
    assert jnp.allclose(out, ref, atol=1e-4, rtol=1e-4), \
        float(jnp.max(jnp.abs(out - ref)))

    print("KERNEL_OK")
</pallas_src>

<mosaic_0001>
module attributes {stable_mosaic.version = 11 : i64} {
  func.func @_update_net_kernel(%arg0: i32, %arg1: memref<16x32xf32, #tpu.memory_space<vmem>>, %arg2: memref<32x128xf32, #tpu.memory_space<vmem>>, %arg3: memref<1x128xf32, #tpu.memory_space<vmem>>, %arg4: memref<8x128xf32, #tpu.memory_space<vmem>>, %arg5: memref<16x128xf32, #tpu.memory_space<vmem>>, %arg6: memref<16x256xf32, #tpu.memory_space<vmem>>, %arg7: memref<16x256xf32, #tpu.memory_space<vmem>>, %arg8: memref<2x32x256xf32, #tpu.memory_space<vmem>>, %arg9: memref<16x128xf32, #tpu.memory_space<vmem>>) attributes {dimension_semantics = [#tpu.dimension_semantics<parallel>], iteration_bounds = array<i64: 1>, scalar_prefetch = 0 : i64, scratch_operands = 1 : i64, tpu.core_type = #tpu.core_type<tc>, window_params = [{transform_indices = @transform_0, window_bounds = array<i64: 16, 32>}, {pipeline_mode = #tpu.pipeline_mode<synchronous>, transform_indices = @transform_1, window_bounds = array<i64: 32, 128>}, {pipeline_mode = #tpu.pipeline_mode<synchronous>, transform_indices = @transform_2, window_bounds = array<i64: 1, 128>}, {pipeline_mode = #tpu.pipeline_mode<synchronous>, transform_indices = @transform_3, window_bounds = array<i64: 8, 128>}, {pipeline_mode = #tpu.pipeline_mode<synchronous>, transform_indices = @transform_4, window_bounds = array<i64: 16, 128>}, {pipeline_mode = #tpu.pipeline_mode<synchronous>, transform_indices = @transform_5, window_bounds = array<i64: 16, 256>}, {pipeline_mode = #tpu.pipeline_mode<synchronous>, transform_indices = @transform_6, window_bounds = array<i64: 16, 256>}, {transform_indices = @transform_7, window_bounds = array<i64: 2, 32, 256>}]} {
    %c0 = arith.constant 0 : index
    %c0_0 = arith.constant 0 : index
    %0 = vector.load %arg1[%c0, %c0_0] : memref<16x32xf32, #tpu.memory_space<vmem>>, vector<16x32xf32>
    %c0_1 = arith.constant 0 : index
    %c0_2 = arith.constant 0 : index
    %1 = vector.load %arg2[%c0_1, %c0_2] : memref<32x128xf32, #tpu.memory_space<vmem>>, vector<32x128xf32>
    %cst = arith.constant dense<0.000000e+00> : vector<16x128xf32>
    %2 = tpu.matmul %0, %1, %cst {dimension_numbers = #tpu.dot_dimension_numbers<[1], [0], [0], [1], [0, 0, 1, 1], [], []>} : vector<16x32xf32>, vector<32x128xf32>, vector<16x128xf32> -> vector<16x128xf32>
    %c0_3 = arith.constant 0 : index
    %c0_4 = arith.constant 0 : index
    %3 = vector.load %arg3[%c0_3, %c0_4] : memref<1x128xf32, #tpu.memory_space<vmem>>, vector<1x128xf32>
    %4 = vector.broadcast %3 : vector<1x128xf32> to vector<16x128xf32>
    %5 = arith.addf %2, %4 : vector<16x128xf32>
    %c0_5 = arith.constant 0 : index
    %c0_6 = arith.constant 0 : index
    %6 = vector.load %arg9[%c0_5, %c0_6] : memref<16x128xf32, #tpu.memory_space<vmem>>, vector<16x128xf32>
    tpu.vector_store %arg9[%c0_5, %c0_6], %5 {strides = array<i32>} : memref<16x128xf32, #tpu.memory_space<vmem>>, vector<16x128xf32>,
    %c0_7 = arith.constant 0 : index
    %c0_8 = arith.constant 0 : index
    %7 = vector.load %arg4[%c0_7, %c0_8] : memref<8x128xf32, #tpu.memory_space<vmem>>, vector<8x128xf32>
    %c0_9 = arith.constant 0 : index
    %c0_10 = arith.constant 0 : index
    %8 = vector.load %arg5[%c0_9, %c0_10] : memref<16x128xf32, #tpu.memory_space<vmem>>, vector<16x128xf32>
    %c0_11 = arith.constant 0 : index
    %c0_12 = arith.constant 0 : index
    %9 = vector.load %arg6[%c0_11, %c0_12] : memref<16x256xf32, #tpu.memory_space<vmem>>, vector<16x256xf32>
    %c0_13 = arith.constant 0 : index
    %c0_14 = arith.constant 0 : index
    %10 = vector.load %arg7[%c0_13, %c0_14] : memref<16x256xf32, #tpu.memory_space<vmem>>, vector<16x256xf32>
    %c0_i32 = arith.constant 0 : i32
    %c2_i32 = arith.constant 2 : i32
    %11 = arith.addi %c0_i32, %c2_i32 : i32
    %c1_i32 = arith.constant 1 : i32
    scf.for %arg10 = %c0_i32 to %11 step %c1_i32  : i32 {
      %c8_i32 = arith.constant 8 : i32
      %12 = arith.muli %arg10, %c8_i32 : i32
      %13 = tpu.assume_multiple %12, 8 : i32
      %14 = arith.index_cast %13 : i32 to index
      %c0_16 = arith.constant 0 : index
      %15 = vector.load %arg9[%14, %c0_16] : memref<16x128xf32, #tpu.memory_space<vmem>>, vector<8x128xf32>
      %16 = tpu.transpose %15, [1, 0] : vector<8x128xf32> -> vector<128x8xf32>
      %17 = vector.extract_strided_slice %16 {offsets = [0, 0], sizes = [96, 8], strides = [1, 1]} : vector<128x8xf32> to vector<96x8xf32>
      %cst_17 = arith.constant dense<0.000000e+00> : vector<96x128xf32>
      %18 = tpu.matmul %17, %7, %cst_17 {dimension_numbers = #tpu.dot_dimension_numbers<[1], [0], [0], [1], [0, 0, 1, 1], [], []>} : vector<96x8xf32>, vector<8x128xf32>, vector<96x128xf32> -> vector<96x128xf32>
      %19 = vector.extract_strided_slice %18 {offsets = [0, 0], sizes = [16, 128], strides = [1, 1]} : vector<96x128xf32> to vector<16x128xf32>
      %20 = arith.mulf %19, %8 : vector<16x128xf32>
      %cst_18 = arith.constant dense<0.000000e+00> : vector<128xf32>
      %21 = vector.multi_reduction <add>, %20, %cst_18 [0] : vector<16x128xf32> to vector<128xf32>
      %22 = vector.shape_cast %21 : vector<128xf32> to vector<1x128xf32>
      %23 = vector.extract_strided_slice %18 {offsets = [16, 0], sizes = [16, 128], strides = [1, 1]} : vector<96x128xf32> to vector<16x128xf32>
      %24 = arith.mulf %23, %8 : vector<16x128xf32>
      %cst_19 = arith.constant dense<0.000000e+00> : vector<128xf32>
      %25 = vector.multi_reduction <add>, %24, %cst_19 [0] : vector<16x128xf32> to vector<128xf32>
      %26 = vector.shape_cast %25 : vector<128xf32> to vector<1x128xf32>
      %27 = vector.extract_strided_slice %18 {offsets = [32, 0], sizes = [32, 128], strides = [1, 1]} : vector<96x128xf32> to vector<32x128xf32>
      %28 = vector.extract_strided_slice %18 {offsets = [64, 0], sizes = [32, 128], strides = [1, 1]} : vector<96x128xf32> to vector<32x128xf32>
      %29 = vector.broadcast %22 : vector<1x128xf32> to vector<32x128xf32>
      %30 = arith.mulf %27, %29 : vector<32x128xf32>
      %31 = vector.broadcast %26 : vector<1x128xf32> to vector<32x128xf32>
      %32 = arith.mulf %28, %31 : vector<32x128xf32>
      %cst_20 = arith.constant 5.000000e-01 : f32
      %33 = vector.broadcast %cst_20 : f32 to vector<32x128xf32>
      %34 = arith.mulf %33, %30 : vector<32x128xf32>
      %35 = math.tanh %34 : vector<32x128xf32>
      %cst_21 = arith.constant 5.000000e-01 : f32
      %36 = vector.broadcast %cst_21 : f32 to vector<32x128xf32>
      %37 = arith.mulf %36, %35 : vector<32x128xf32>
      %cst_22 = arith.constant 5.000000e-01 : f32
      %38 = vector.broadcast %cst_22 : f32 to vector<32x128xf32>
      %39 = arith.addf %37, %38 : vector<32x128xf32>
      %40 = arith.mulf %30, %39 : vector<32x128xf32>
      %cst_23 = arith.constant 5.000000e-01 : f32
      %41 = vector.broadcast %cst_23 : f32 to vector<32x128xf32>
      %42 = arith.mulf %41, %32 : vector<32x128xf32>
      %43 = math.tanh %42 : vector<32x128xf32>
      %cst_24 = arith.constant 5.000000e-01 : f32
      %44 = vector.broadcast %cst_24 : f32 to vector<32x128xf32>
      %45 = arith.mulf %44, %43 : vector<32x128xf32>
      %cst_25 = arith.constant 5.000000e-01 : f32
      %46 = vector.broadcast %cst_25 : f32 to vector<32x128xf32>
      %47 = arith.addf %45, %46 : vector<32x128xf32>
      %48 = arith.mulf %32, %47 : vector<32x128xf32>
      %cst_26 = arith.constant 0.000000e+00 : f32
      %49 = vector.broadcast %cst_26 : f32 to vector<32x256xf32>
      %cst_27 = arith.constant 0.000000e+00 : f32
      %50 = vector.broadcast %cst_27 : f32 to vector<32x256xf32>
      %51 = vector.extract_strided_slice %40 {offsets = [0, 0], sizes = [32, 16], strides = [1, 1]} : vector<32x128xf32> to vector<32x16xf32>
      %52 = vector.extract_strided_slice %48 {offsets = [0, 0], sizes = [32, 16], strides = [1, 1]} : vector<32x128xf32> to vector<32x16xf32>
      %cst_28 = arith.constant dense<0.000000e+00> : vector<32x256xf32>
      %53 = tpu.matmul %51, %9, %cst_28 {dimension_numbers = #tpu.dot_dimension_numbers<[1], [0], [0], [1], [0, 0, 1, 1], [], []>} : vector<32x16xf32>, vector<16x256xf32>, vector<32x256xf32> -> vector<32x256xf32>
      %cst_29 = arith.constant dense<0.000000e+00> : vector<32x256xf32>
      %54 = tpu.matmul %52, %10, %cst_29 {dimension_numbers = #tpu.dot_dimension_numbers<[1], [0], [0], [1], [0, 0, 1, 1], [], []>} : vector<32x16xf32>, vector<16x256xf32>, vector<32x256xf32> -> vector<32x256xf32>
      %55 = arith.mulf %53, %54 : vector<32x256xf32>
      %56 = arith.addf %49, %55 : vector<32x256xf32>
      %57 = vector.extract_strided_slice %40 {offsets = [0, 16], sizes = [32, 16], strides = [1, 1]} : vector<32x128xf32> to vector<32x16xf32>
      %58 = vector.extract_strided_slice %48 {offsets = [0, 16], sizes = [32, 16], strides = [1, 1]} : vector<32x128xf32> to vector<32x16xf32>
      %cst_30 = arith.constant dense<0.000000e+00> : vector<32x256xf32>
      %59 = tpu.matmul %57, %9, %cst_30 {dimension_numbers = #tpu.dot_dimension_numbers<[1], [0], [0], [1], [0, 0, 1, 1], [], []>} : vector<32x16xf32>, vector<16x256xf32>, vector<32x256xf32> -> vector<32x256xf32>
      %cst_31 = arith.constant dense<0.000000e+00> : vector<32x256xf32>
      %60 = tpu.matmul %58, %10, %cst_31 {dimension_numbers = #tpu.dot_dimension_numbers<[1], [0], [0], [1], [0, 0, 1, 1], [], []>} : vector<32x16xf32>, vector<16x256xf32>, vector<32x256xf32> -> vector<32x256xf32>
      %61 = arith.mulf %59, %60 : vector<32x256xf32>
      %62 = arith.addf %50, %61 : vector<32x256xf32>
      %63 = vector.extract_strided_slice %40 {offsets = [0, 32], sizes = [32, 16], strides = [1, 1]} : vector<32x128xf32> to vector<32x16xf32>
      %64 = vector.extract_strided_slice %48 {offsets = [0, 32], sizes = [32, 16], strides = [1, 1]} : vector<32x128xf32> to vector<32x16xf32>
      %cst_32 = arith.constant dense<0.000000e+00> : vector<32x256xf32>
      %65 = tpu.matmul %63, %9, %cst_32 {dimension_numbers = #tpu.dot_dimension_numbers<[1], [0], [0], [1], [0, 0, 1, 1], [], []>} : vector<32x16xf32>, vector<16x256xf32>, vector<32x256xf32> -> vector<32x256xf32>
      %cst_33 = arith.constant dense<0.000000e+00> : vector<32x256xf32>
      %66 = tpu.matmul %64, %10, %cst_33 {dimension_numbers = #tpu.dot_dimension_numbers<[1], [0], [0], [1], [0, 0, 1, 1], [], []>} : vector<32x16xf32>, vector<16x256xf32>, vector<32x256xf32> -> vector<32x256xf32>
      %67 = arith.mulf %65, %66 : vector<32x256xf32>
      %68 = arith.addf %56, %67 : vector<32x256xf32>
      %69 = vector.extract_strided_slice %40 {offsets = [0, 48], sizes = [32, 16], strides = [1, 1]} : vector<32x128xf32> to vector<32x16xf32>
      %70 = vector.extract_strided_slice %48 {offsets = [0, 48], sizes = [32, 16], strides = [1, 1]} : vector<32x128xf32> to vector<32x16xf32>
      %cst_34 = arith.constant dense<0.000000e+00> : vector<32x256xf32>
      %71 = tpu.matmul %69, %9, %cst_34 {dimension_numbers = #tpu.dot_dimension_numbers<[1], [0], [0], [1], [0, 0, 1, 1], [], []>} : vector<32x16xf32>, vector<16x256xf32>, vector<32x256xf32> -> vector<32x256xf32>
      %cst_35 = arith.constant dense<0.000000e+00> : vector<32x256xf32>
      %72 = tpu.matmul %70, %10, %cst_35 {dimension_numbers = #tpu.dot_dimension_numbers<[1], [0], [0], [1], [0, 0, 1, 1], [], []>} : vector<32x16xf32>, vector<16x256xf32>, vector<32x256xf32> -> vector<32x256xf32>
      %73 = arith.mulf %71, %72 : vector<32x256xf32>
      %74 = arith.addf %62, %73 : vector<32x256xf32>
      %75 = vector.extract_strided_slice %40 {offsets = [0, 64], sizes = [32, 16], strides = [1, 1]} : vector<32x128xf32> to vector<32x16xf32>
      %76 = vector.extract_strided_slice %48 {offsets = [0, 64], sizes = [32, 16], strides = [1, 1]} : vector<32x128xf32> to vector<32x16xf32>
      %cst_36 = arith.constant dense<0.000000e+00> : vector<32x256xf32>
      %77 = tpu.matmul %75, %9, %cst_36 {dimension_numbers = #tpu.dot_dimension_numbers<[1], [0], [0], [1], [0, 0, 1, 1], [], []>} : vector<32x16xf32>, vector<16x256xf32>, vector<32x256xf32> -> vector<32x256xf32>
      %cst_37 = arith.constant dense<0.000000e+00> : vector<32x256xf32>
      %78 = tpu.matmul %76, %10, %cst_37 {dimension_numbers = #tpu.dot_dimension_numbers<[1], [0], [0], [1], [0, 0, 1, 1], [], []>} : vector<32x16xf32>, vector<16x256xf32>, vector<32x256xf32> -> vector<32x256xf32>
      %79 = arith.mulf %77, %78 : vector<32x256xf32>
      %80 = arith.addf %68, %79 : vector<32x256xf32>
      %81 = vector.extract_strided_slice %40 {offsets = [0, 80], sizes = [32, 16], strides = [1, 1]} : vector<32x128xf32> to vector<32x16xf32>
      %82 = vector.extract_strided_slice %48 {offsets = [0, 80], sizes = [32, 16], strides = [1, 1]} : vector<32x128xf32> to vector<32x16xf32>
      %cst_38 = arith.constant dense<0.000000e+00> : vector<32x256xf32>
      %83 = tpu.matmul %81, %9, %cst_38 {dimension_numbers = #tpu.dot_dimension_numbers<[1], [0], [0], [1], [0, 0, 1, 1], [], []>} : vector<32x16xf32>, vector<16x256xf32>, vector<32x256xf32> -> vector<32x256xf32>
      %cst_39 = arith.constant dense<0.000000e+00> : vector<32x256xf32>
      %84 = tpu.matmul %82, %10, %cst_39 {dimension_numbers = #tpu.dot_dimension_numbers<[1], [0], [0], [1], [0, 0, 1, 1], [], []>} : vector<32x16xf32>, vector<16x256xf32>, vector<32x256xf32> -> vector<32x256xf32>
      %85 = arith.mulf %83, %84 : vector<32x256xf32>
      %86 = arith.addf %74, %85 : vector<32x256xf32>
      %87 = vector.extract_strided_slice %40 {offsets = [0, 96], sizes = [32, 16], strides = [1, 1]} : vector<32x128xf32> to vector<32x16xf32>
      %88 = vector.extract_strided_slice %48 {offsets = [0, 96], sizes = [32, 16], strides = [1, 1]} : vector<32x128xf32> to vector<32x16xf32>
      %cst_40 = arith.constant dense<0.000000e+00> : vector<32x256xf32>
      %89 = tpu.matmul %87, %9, %cst_40 {dimension_numbers = #tpu.dot_dimension_numbers<[1], [0], [0], [1], [0, 0, 1, 1], [], []>} : vector<32x16xf32>, vector<16x256xf32>, vector<32x256xf32> -> vector<32x256xf32>
      %cst_41 = arith.constant dense<0.000000e+00> : vector<32x256xf32>
      %90 = tpu.matmul %88, %10, %cst_41 {dimension_numbers = #tpu.dot_dimension_numbers<[1], [0], [0], [1], [0, 0, 1, 1], [], []>} : vector<32x16xf32>, vector<16x256xf32>, vector<32x256xf32> -> vector<32x256xf32>
      %91 = arith.mulf %89, %90 : vector<32x256xf32>
      %92 = arith.addf %80, %91 : vector<32x256xf32>
      %93 = vector.extract_strided_slice %40 {offsets = [0, 112], sizes = [32, 16], strides = [1, 1]} : vector<32x128xf32> to vector<32x16xf32>
      %94 = vector.extract_strided_slice %48 {offsets = [0, 112], sizes = [32, 16], strides = [1, 1]} : vector<32x128xf32> to vector<32x16xf32>
      %cst_42 = arith.constant dense<0.000000e+00> : vector<32x256xf32>
      %95 = tpu.matmul %93, %9, %cst_42 {dimension_numbers = #tpu.dot_dimension_numbers<[1], [0], [0], [1], [0, 0, 1, 1], [], []>} : vector<32x16xf32>, vector<16x256xf32>, vector<32x256xf32> -> vector<32x256xf32>
      %cst_43 = arith.constant dense<0.000000e+00> : vector<32x256xf32>
      %96 = tpu.matmul %94, %10, %cst_43 {dimension_numbers = #tpu.dot_dimension_numbers<[1], [0], [0], [1], [0, 0, 1, 1], [], []>} : vector<32x16xf32>, vector<16x256xf32>, vector<32x256xf32> -> vector<32x256xf32>
      %97 = arith.mulf %95, %96 : vector<32x256xf32>
      %98 = arith.addf %86, %97 : vector<32x256xf32>
      %99 = arith.addf %92, %98 : vector<32x256xf32>
      %100 = arith.index_cast %arg10 : i32 to index
      %c0_44 = arith.constant 0 : index
      %c0_45 = arith.constant 0 : index
      %101 = vector.load %arg8[%100, %c0_44, %c0_45] : memref<2x32x256xf32, #tpu.memory_space<vmem>>, vector<1x32x256xf32>
      %102 = vector.shape_cast %101 : vector<1x32x256xf32> to vector<32x256xf32>
      %103 = vector.shape_cast %99 : vector<32x256xf32> to vector<1x32x256xf32>
      tpu.vector_store %arg8[%100, %c0_44, %c0_45], %103 {strides = array<i32>} : memref<2x32x256xf32, #tpu.memory_space<vmem>>, vector<1x32x256xf32>,
    }
    %c2_i32_15 = arith.constant 2 : i32
    return
  }
  func.func @transform_0(%arg0: i32) -> (i32, i32) {
    %c0_i32 = arith.constant 0 : i32
    %c0_i32_0 = arith.constant 0 : i32
    return %arg0, %c0_i32 : i32, i32
  }
  func.func @transform_1(%arg0: i32) -> (i32, i32) {
    %c0_i32 = arith.constant 0 : i32
    %c0_i32_0 = arith.constant 0 : i32
    %c0_i32_1 = arith.constant 0 : i32
    return %c0_i32, %c0_i32_0 : i32, i32
  }
  func.func @transform_2(%arg0: i32) -> (i32, i32) {
    %c0_i32 = arith.constant 0 : i32
    %c0_i32_0 = arith.constant 0 : i32
    %c0_i32_1 = arith.constant 0 : i32
    return %c0_i32, %c0_i32_0 : i32, i32
  }
  func.func @transform_3(%arg0: i32) -> (i32, i32) {
    %c0_i32 = arith.constant 0 : i32
    %c0_i32_0 = arith.constant 0 : i32
    %c0_i32_1 = arith.constant 0 : i32
    return %c0_i32, %c0_i32_0 : i32, i32
  }
  func.func @transform_4(%arg0: i32) -> (i32, i32) {
    %c0_i32 = arith.constant 0 : i32
    %c0_i32_0 = arith.constant 0 : i32
    %c0_i32_1 = arith.constant 0 : i32
    return %c0_i32, %c0_i32_0 : i32, i32
  }
  func.func @transform_5(%arg0: i32) -> (i32, i32) {
    %c0_i32 = arith.constant 0 : i32
    %c0_i32_0 = arith.constant 0 : i32
    %c0_i32_1 = arith.constant 0 : i32
    return %c0_i32, %c0_i32_0 : i32, i32
  }
  func.func @transform_6(%arg0: i32) -> (i32, i32) {
    %c0_i32 = arith.constant 0 : i32
    %c0_i32_0 = arith.constant 0 : i32
    %c0_i32_1 = arith.constant 0 : i32
    return %c0_i32, %c0_i32_0 : i32, i32
  }
  func.func @transform_7(%arg0: i32) -> (i32, i32, i32) {
    %c0_i32 = arith.constant 0 : i32
    %c0_i32_0 = arith.constant 0 : i32
    %c0_i32_1 = arith.constant 0 : i32
    return %arg0, %c0_i32, %c0_i32_0 : i32, i32, i32
  }
}

</mosaic_0001>

<llo_original>
// kernel: tpu_custom_call.1
$region0: #{tpu_custom_call.1}
  #allocation0 [shape = 'u32[]', space=smem, size = 0x4, offset = 0x4, fixed_abs, tag = 'smem constant byte address 0x4 - core index']
  #allocation1 [shape = 'u32[144,128]{1,0:T(1,128)}', space=vmem, size = 0x12000, scoped, tag = 'internal scratch']
  #allocation2 [shape = 'f32[16,128]{1,0:T(8,128)}', space=vmem, size = 0x2000, scoped, tag = 'scratch operand']
  %s0 = inlined_call_operand.hbm [shape: f32[16,32], index: 0, kind: input, shape index: {}]
  %s1 = inlined_call_operand.hbm [shape: f32[32,128], index: 1, kind: input, shape index: {}]
  %s2 = inlined_call_operand.vmem [shape: f32[1,128], index: 2, kind: input, shape index: {}]
  %s3 = inlined_call_operand.vmem [shape: f32[8,128], index: 3, kind: input, shape index: {}]
  %s4 = inlined_call_operand.hbm [shape: f32[16,128], index: 4, kind: input, shape index: {}]
  %s5 = inlined_call_operand.hbm [shape: f32[16,256], index: 5, kind: input, shape index: {}]
  %s6 = inlined_call_operand.hbm [shape: f32[16,256], index: 6, kind: input, shape index: {}]
  %s7 = inlined_call_operand.hbm [shape: f32[2,32,256], index: 7, kind: output, shape index: {}]
  %s8 = sld [smem:[#allocation0]]
  $region65: #{tpu_custom_call.1} parent=0
    _
  %s10 = ssub.s32 1, %s8
  %s11 = scalar_select 0, %s10, %s8
  $region1: #{tpu_custom_call.1} parent=0
    #allocation3 [shape = 'u8[8192]{0}', space=vmem, size = 0x2000, scoped, tag = 'input window, operand 0, single buffered']
    #allocation4 [shape = 's32[1]{0}', space=sflag, size = 0x4, scoped, tag = 'scoped memory for tpu_custom_call.1']
    #allocation5 [shape = 's32[1]{0}', space=sflag, size = 0x4, scoped, tag = 'scoped memory for tpu_custom_call.1']
    #allocation6 [shape = 'u8[16384]{0}', space=vmem, size = 0x4000, scoped, tag = 'input window, operand 1, single buffered']
    #allocation7 [shape = 's32[1]{0}', space=sflag, size = 0x4, scoped, tag = 'scoped memory for tpu_custom_call.1']
    #allocation8 [shape = 'u8[8192]{0}', space=vmem, size = 0x2000, scoped, tag = 'input window, operand 4, single buffered']
    #allocation9 [shape = 'u8[16384]{0}', space=vmem, size = 0x4000, scoped, tag = 'input window, operand 5, single buffered']
    #allocation10 [shape = 's32[1]{0}', space=sflag, size = 0x4, scoped, tag = 'scoped memory for tpu_custom_call.1']
    #allocation11 [shape = 'u8[16384]{0}', space=vmem, size = 0x4000, scoped, tag = 'input window, operand 6, single buffered']
    #allocation12 [shape = 'u8[65536]{0}', space=vmem, size = 0x10000, scoped, tag = 'output window, operand 0, single buffered']
    %12 = vsyncpa [#allocation4], 0
    %13 = vsyncpa [#allocation7], 0
    %14 = vsyncpa [#allocation10], 0
    %15 = vsyncpa [#allocation5], 0
    // Predicated region
    $region2: #{tpu_custom_call.1} parent=1 // pred_check
      _
    $region3: #{tpu_custom_call.1} parent=1 // pred_check_branch
      %17 = sbr.rel (0) target = $region5
    $region4: #{tpu_custom_call.1} parent=1 // pred_region
      %s19 = ssub.s32 256, 256
      %20 = vsyncadd [#allocation4], %s19
      %s21 = sshll.u32 [#allocation3], 4
      %s22 = int_to_ptr.vmem [resolvable:$true] %s21
      %27 = dma.hbm_to_vmem [thread:$0]  %s0, 256, %s22, [#allocation4], 128, 128, 8
    $region5: #{tpu_custom_call.1} parent=1 // pred_fallthru
      _
    // Predicated region
    $region6: #{tpu_custom_call.1} parent=1 // pred_check
      _
    $region7: #{tpu_custom_call.1} parent=1 // pred_check_branch
      %29 = sbr.rel (0) target = $region9
    $region8: #{tpu_custom_call.1} parent=1 // pred_region
      %s31 = ssub.s32 512, 512
      %32 = vsyncadd [#allocation7], %s31
      %s33 = sshll.u32 [#allocation6], 4
      %s34 = int_to_ptr.vmem [resolvable:$true] %s33
      %39 = dma.hbm_to_vmem [thread:$0]  %s1, 512, %s34, [#allocation7], 128, 128, 8
    $region9: #{tpu_custom_call.1} parent=1 // pred_fallthru
      _
    // Predicated region
    $region10: #{tpu_custom_call.1} parent=1 // pred_check
      _
    $region11: #{tpu_custom_call.1} parent=1 // pred_check_branch
      %41 = sbr.rel (0) target = $region13
    $region12: #{tpu_custom_call.1} parent=1 // pred_region
      _
    $region13: #{tpu_custom_call.1} parent=1 // pred_fallthru
      _
    // Predicated region
    $region14: #{tpu_custom_call.1} parent=1 // pred_check
      _
    $region15: #{tpu_custom_call.1} parent=1 // pred_check_branch
      %43 = sbr.rel (0) target = $region17
    $region16: #{tpu_custom_call.1} parent=1 // pred_region
      _
    $region17: #{tpu_custom_call.1} parent=1 // pred_fallthru
      _
    // Predicated region
    $region18: #{tpu_custom_call.1} parent=1 // pred_check
      _
    $region19: #{tpu_custom_call.1} parent=1 // pred_check_branch
      %45 = sbr.rel (0) target = $region21
    $region20: #{tpu_custom_call.1} parent=1 // pred_region
      %s47 = ssub.s32 256, 256
      %48 = vsyncadd [#allocation7], %s47
      %s49 = sshll.u32 [#allocation8], 4
      %s50 = int_to_ptr.vmem [resolvable:$true] %s49
      %55 = dma.hbm_to_vmem [thread:$0]  %s4, 256, %s50, [#allocation7], 128, 128, 8
    $region21: #{tpu_custom_call.1} parent=1 // pred_fallthru
      _
    // Predicated region
    $region22: #{tpu_custom_call.1} parent=1 // pred_check
      _
    $region23: #{tpu_custom_call.1} parent=1 // pred_check_branch
      %57 = sbr.rel (0) target = $region25
    $region24: #{tpu_custom_call.1} parent=1 // pred_region
      %s59 = ssub.s32 512, 512
      %60 = vsyncadd [#allocation10], %s59
      %s61 = sshll.u32 [#allocation9], 4
      %s62 = int_to_ptr.vmem [resolvable:$true] %s61
      %67 = dma.hbm_to_vmem [thread:$0]  %s5, 512, %s62, [#allocation10], 256, 256, 16
    $region25: #{tpu_custom_call.1} parent=1 // pred_fallthru
      _
    // Predicated region
    $region26: #{tpu_custom_call.1} parent=1 // pred_check
      _
    $region27: #{tpu_custom_call.1} parent=1 // pred_check_branch
      %69 = sbr.rel (0) target = $region29
    $region28: #{tpu_custom_call.1} parent=1 // pred_region
      %s71 = ssub.s32 512, 512
      %72 = vsyncadd [#allocation10], %s71
      %s73 = sshll.u32 [#allocation11], 4
      %s74 = int_to_ptr.vmem [resolvable:$true] %s73
      %79 = dma.hbm_to_vmem [thread:$0]  %s6, 512, %s74, [#allocation10], 256, 256, 16
    $region29: #{tpu_custom_call.1} parent=1 // pred_fallthru
      _
    // Predicated region
    $region30: #{tpu_custom_call.1} parent=1 // pred_check
      _
    $region31: #{tpu_custom_call.1} parent=1 // pred_check_branch
      %81 = sbr.rel (0) target = $region33
    $region32: #{tpu_custom_call.1} parent=1 // pred_region
      %82 = dma.done [#allocation4], 256
    $region33: #{tpu_custom_call.1} parent=1 // pred_fallthru
      _
    // Predicated region
    $region34: #{tpu_custom_call.1} parent=1 // pred_check
      _
    $region35: #{tpu_custom_call.1} parent=1 // pred_check_branch
      %84 = sbr.rel (0) target = $region37
    $region36: #{tpu_custom_call.1} parent=1 // pred_region
      %85 = dma.done [#allocation7], 512
    $region37: #{tpu_custom_call.1} parent=1 // pred_fallthru
      _
    // Predicated region
    $region38: #{tpu_custom_call.1} parent=1 // pred_check
      _
    $region39: #{tpu_custom_call.1} parent=1 // pred_check_branch
      %87 = sbr.rel (0) target = $region41
    $region40: #{tpu_custom_call.1} parent=1 // pred_region
      %88 = dma.done [#allocation7], 256
    $region41: #{tpu_custom_call.1} parent=1 // pred_fallthru
      _
    // Predicated region
    $region42: #{tpu_custom_call.1} parent=1 // pred_check
      _
    $region43: #{tpu_custom_call.1} parent=1 // pred_check_branch
      %90 = sbr.rel (0) target = $region45
    $region44: #{tpu_custom_call.1} parent=1 // pred_region
      %91 = dma.done [#allocation10], 512
    $region45: #{tpu_custom_call.1} parent=1 // pred_fallthru
      _
    // Predicated region
    $region46: #{tpu_custom_call.1} parent=1 // pred_check
      _
    $region47: #{tpu_custom_call.1} parent=1 // pred_check_branch
      %93 = sbr.rel (0) target = $region49
    $region48: #{tpu_custom_call.1} parent=1 // pred_region
      %94 = dma.done [#allocation10], 512
    $region49: #{tpu_custom_call.1} parent=1 // pred_fallthru
      _
    %v95 = vld [vmem:[#allocation3] sm:$0xff]
    %v96 = vld [vmem:[#allocation3 + $0x8] sm:$0xff]
    %v97 = vld [vmem:[#allocation6] sm:$0xff]
    %v98 = vld [vmem:[#allocation6 + $0x8] sm:$0xff]
    %v99 = vld [vmem:[#allocation6 + $0x10] sm:$0xff]
    %v100 = vld [vmem:[#allocation6 + $0x18] sm:$0xff]
    %v101 = vld [vmem:[%s2] sm:$0x1]
    %v103 = vlaneseq
    %v104 = vshrl.u32 %v103, 7
    %v105 = vsub.s32 0, %v104
    %v106 = vrot.slane %v101, %v105
    %vm108 = vcmask 261120
    %v110 = vsel %vm108, %v95, 0
    %v113 = vsel %vm108, %v96, 0
    %115 = vmatprep.subr.mxu0 0.0
    %116 = vmatpush1.msra.mxu0 %v97
    %117 = vmatprep.subr.mxu0 0.0
    %118 = vmatpush1.msra.mxu0 %v98
    %119 = vmatprep.subr.mxu0 0.0
    %120 = vmatpush1.msra.mxu0 %v99
    %121 = vmatprep.subr.mxu0 0.0
    %122 = vmatpush1.msra.mxu0 %v100
    %123 = vmatprep.subr.mxu0 0.0
    %124 = vmatpush1.msra.mxu0 0.0
    %125 = vmatprep.subr.mxu0 0.0
    %126 = vmatpush1.msra.mxu0 0.0
    %127 = vmatprep.subr.mxu0 0.0
    %128 = vmatpush1.msra.mxu0 0.0
    %129 = vmatprep.subr.mxu0 0.0
    %130 = vmatpush1.msra.mxu0 0.0
    %131 = vmatprep.subr.mxu0 0.0
    %132 = vmatpush1.msra.mxu0 0.0
    %133 = vmatprep.subr.mxu0 0.0
    %134 = vmatpush1.msra.mxu0 0.0
    %135 = vmatprep.subr.mxu0 0.0
    %136 = vmatpush1.msra.mxu0 0.0
    %137 = vmatprep.subr.mxu0 0.0
    %138 = vmatpush1.msra.mxu0 0.0
    %139 = vmatprep.subr.mxu0 0.0
    %140 = vmatpush1.msra.mxu0 0.0
    %141 = vmatprep.subr.mxu0 0.0
    %142 = vmatpush1.msra.mxu0 0.0
    %143 = vmatprep.subr.mxu0 0.0
    %144 = vmatpush1.msra.mxu0 0.0
    %145 = vmatprep.subr.mxu0 0.0
    %146 = vmatpush1.msra.mxu0 0.0
    %147 = vmatprep.subr.mxu0 0.0
    %148 = vmatpush1.msra.mxu0 0.0
    %149 = vmatprep.subr.mxu0 0.0
    %150 = vmatpush1.msra.mxu0 0.0
    %151 = vmatprep.subr.mxu0 0.0
    %152 = vmatpush1.msra.mxu0 0.0
    %153 = vmatprep.subr.mxu0 0.0
    %154 = vmatpush1.msra.mxu0 0.0
    %155 = vmatprep.subr.mxu0 0.0
    %156 = vmatpush1.msra.mxu0 0.0
    %157 = vmatprep.subr.mxu0 0.0
    %158 = vmatpush1.msra.mxu0 0.0
    %159 = vmatprep.subr.mxu0 0.0
    %160 = vmatpush1.msra.mxu0 0.0
    %161 = vmatprep.subr.mxu0 0.0
    %162 = vmatpush1.msra.mxu0 0.0
    %163 = vmatprep.subr.mxu0 0.0
    %164 = vmatpush1.msra.mxu0 0.0
    %165 = vmatprep.subr.mxu0 0.0
    %166 = vmatpush1.msra.mxu0 0.0
    %167 = vmatprep.subr.mxu0 0.0
    %168 = vmatpush1.msra.mxu0 0.0
    %169 = vmatprep.subr.mxu0 0.0
    %170 = vmatpush1.msra.mxu0 0.0
    %171 = vmatprep.subr.mxu0 0.0
    %172 = vmatpush1.msra.mxu0 0.0
    %173 = vmatprep.subr.mxu0 0.0
    %174 = vmatpush1.msra.mxu0 0.0
    %175 = vmatprep.subr.mxu0 0.0
    %176 = vmatpush1.msra.mxu0 0.0
    %177 = vmatprep.subr.mxu0 0.0
    %178 = vmatpush1.msra.mxu0 0.0
    %179 = vmatprep.mubr.f32.mxu0 0.0
    %180 = vmatmul.mubr.f32.gmra.mrb[0].mxu0 %v110
    %v181 = vpop.f32.mrb[0].mxu0
    %v182 = vadd.f32 %v106, %v181
    %v183 = vpop.f32.mrb[0].mxu0
    %184 = vmatprep.mubr.f32.mxu0 0.0
    %185 = vmatmul.mubr.f32.gmra.mrb[0].mxu0 %v113
    %v186 = vpop.f32.mrb[0].mxu0
    %v187 = vadd.f32 %v106, %v186
    %v188 = vpop.f32.mrb[0].mxu0
    %189 = vdwg.mxu0
    %190 = vst [vmem:[#allocation2] sm:$0xff] %v182
    %191 = vst [vmem:[#allocation2 + $0x8] sm:$0xff] %v187
    %v192 = vld [vmem:[%s3] sm:$0xff]
    %v193 = vld [vmem:[#allocation8] sm:$0xff]
    %v194 = vld [vmem:[#allocation8 + $0x8] sm:$0xff]
    %v195 = vld [vmem:[#allocation9] sm:$0xff]
    %v196 = vld [vmem:[#allocation9 + $0x8] sm:$0xff]
    %v197 = vld [vmem:[#allocation9 + $0x10] sm:$0xff]
    %v198 = vld [vmem:[#allocation9 + $0x18] sm:$0xff]
    %v199 = vld [vmem:[#allocation11] sm:$0xff]
    %v200 = vld [vmem:[#allocation11 + $0x8] sm:$0xff]
    %v201 = vld [vmem:[#allocation11 + $0x10] sm:$0xff]
    %v202 = vld [vmem:[#allocation11 + $0x18] sm:$0xff]
    loop: start=0, step=1, limit=2
    $region50: #{tpu_custom_call.1} parent=1 // loop_pre_header
      _
    $region51: #{tpu_custom_call.1} parent=1 // loop_header
      %s204 = sphi 0, %s208
      %p205 = scmp.ge.s32.totalorder %s204, 2
    $region52: #{tpu_custom_call.1} parent=1 // loop_header_branch
      %207 = sbr.rel (%p205) target = $region56
    $region53: #{tpu_custom_call.1} parent=1 // loop_body
      %s209 = smul.u32 %s204, 8
      %s210 = scalar_lea.vmem [#allocation2], %s209
      %v211 = vld [vmem:[%s210] sm:$0xff]
      %212 = vxpose.xlu0.b32.start [1/16] %v211, 128
      %213 = vxpose.xlu0.b32.cont [2/16] 0.0, 128
      %214 = vxpose.xlu0.b32.cont [3/16] 0.0, 128
      %215 = vxpose.xlu0.b32.cont [4/16] 0.0, 128
      %216 = vxpose.xlu0.b32.cont [5/16] 0.0, 128
      %217 = vxpose.xlu0.b32.cont [6/16] 0.0, 128
      %218 = vxpose.xlu0.b32.cont [7/16] 0.0, 128
      %219 = vxpose.xlu0.b32.cont [8/16] 0.0, 128
      %220 = vxpose.xlu0.b32.cont [9/16] 0.0, 128
      %221 = vxpose.xlu0.b32.cont [10/16] 0.0, 128
      %222 = vxpose.xlu0.b32.cont [11/16] 0.0, 128
      %223 = vxpose.xlu0.b32.cont [12/16] 0.0, 128
      %224 = vxpose.xlu0.b32.cont [13/16] 0.0, 128
      %225 = vxpose.xlu0.b32.cont [14/16] 0.0, 128
      %226 = vxpose.xlu0.b32.cont [15/16] 0.0, 128
      %227 = vxpose.xlu0.b32.end [16/16] 0.0, 128
      %v228 = vpop.trf.xlu0
      %v229 = vpop.trf.xlu0
      %v230 = vpop.trf.xlu0
      %v231 = vpop.trf.xlu0
      %v232 = vpop.trf.xlu0
      %v233 = vpop.trf.xlu0
      %v234 = vpop.trf.xlu0
      %v235 = vpop.trf.xlu0
      %v236 = vpop.trf.xlu0
      %v237 = vpop.trf.xlu0
      %v238 = vpop.trf.xlu0
      %v239 = vpop.trf.xlu0
      %v240 = vpop.trf.xlu0
      %v241 = vpop.trf.xlu0
      %v242 = vpop.trf.xlu0
      %v243 = vpop.trf.xlu0
      %vm244 = vcmask 64512
      %v246 = vsel %vm244, %v228, 0
      %v249 = vsel %vm244, %v229, 0
      %v252 = vsel %vm244, %v230, 0
      %v255 = vsel %vm244, %v231, 0
      %v258 = vsel %vm244, %v232, 0
      %v261 = vsel %vm244, %v233, 0
      %v264 = vsel %vm244, %v234, 0
      %v267 = vsel %vm244, %v235, 0
      %v270 = vsel %vm244, %v236, 0
      %v273 = vsel %vm244, %v237, 0
      %v276 = vsel %vm244, %v238, 0
      %v279 = vsel %vm244, %v239, 0
      %281 = vmatprep.subr.mxu0 0.0
      %282 = vmatpush1.msra.mxu0 %v192
      %283 = vmatprep.subr.mxu0 0.0
      %284 = vmatpush1.msra.mxu0 0.0
      %285 = vmatprep.subr.mxu0 0.0
      %286 = vmatpush1.msra.mxu0 0.0
      %287 = vmatprep.subr.mxu0 0.0
      %288 = vmatpush1.msra.mxu0 0.0
      %289 = vmatprep.subr.mxu0 0.0
      %290 = vmatpush1.msra.mxu0 0.0
      %291 = vmatprep.subr.mxu0 0.0
      %292 = vmatpush1.msra.mxu0 0.0
      %293 = vmatprep.subr.mxu0 0.0
      %294 = vmatpush1.msra.mxu0 0.0
      %295 = vmatprep.subr.mxu0 0.0
      %296 = vmatpush1.msra.mxu0 0.0
      %297 = vmatprep.subr.mxu0 0.0
      %298 = vmatpush1.msra.mxu0 0.0
      %299 = vmatprep.subr.mxu0 0.0
      %300 = vmatpush1.msra.mxu0 0.0
      %301 = vmatprep.subr.mxu0 0.0
      %302 = vmatpush1.msra.mxu0 0.0
      %303 = vmatprep.subr.mxu0 0.0
      %304 = vmatpush1.msra.mxu0 0.0
      %305 = vmatprep.subr.mxu0 0.0
      %306 = vmatpush1.msra.mxu0 0.0
      %307 = vmatprep.subr.mxu0 0.0
      %308 = vmatpush1.msra.mxu0 0.0
      %309 = vmatprep.subr.mxu0 0.0
      %310 = vmatpush1.msra.mxu0 0.0
      %311 = vmatprep.subr.mxu0 0.0
      %312 = vmatpush1.msra.mxu0 0.0
      %313 = vmatprep.subr.mxu0 0.0
      %314 = vmatpush1.msra.mxu0 0.0
      %315 = vmatprep.subr.mxu0 0.0
      %316 = vmatpush1.msra.mxu0 0.0
      %317 = vmatprep.subr.mxu0 0.0
      %318 = vmatpush1.msra.mxu0 0.0
      %319 = vmatprep.subr.mxu0 0.0
      %320 = vmatpush1.msra.mxu0 0.0
      %321 = vmatprep.subr.mxu0 0.0
      %322 = vmatpush1.msra.mxu0 0.0
      %323 = vmatprep.subr.mxu0 0.0
      %324 = vmatpush1.msra.mxu0 0.0
      %325 = vmatprep.subr.mxu0 0.0
      %326 = vmatpush1.msra.mxu0 0.0
      %327 = vmatprep.subr.mxu0 0.0
      %328 = vmatpush1.msra.mxu0 0.0
      %329 = vmatprep.subr.mxu0 0.0
      %330 = vmatpush1.msra.mxu0 0.0
      %331 = vmatprep.subr.mxu0 0.0
      %332 = vmatpush1.msra.mxu0 0.0
      %333 = vmatprep.subr.mxu0 0.0
      %334 = vmatpush1.msra.mxu0 0.0
      %335 = vmatprep.subr.mxu0 0.0
      %336 = vmatpush1.msra.mxu0 0.0
      %337 = vmatprep.subr.mxu0 0.0
      %338 = vmatpush1.msra.mxu0 0.0
      %339 = vmatprep.subr.mxu0 0.0
      %340 = vmatpush1.msra.mxu0 0.0
      %341 = vmatprep.subr.mxu0 0.0
      %342 = vmatpush1.msra.mxu0 0.0
      %343 = vmatprep.subr.mxu0 0.0
      %344 = vmatpush1.msra.mxu0 0.0
      %345 = vmatprep.mubr.f32.mxu0 0.0
      %346 = vmatmul.mubr.f32.gmra.mrb[0].mxu0 %v246
      %v347 = vpop.f32.mrb[0].mxu0
      %v348 = vadd.f32 0.0, %v347
      %v349 = vpop.f32.mrb[0].mxu0
      %350 = vmatprep.mubr.f32.mxu0 0.0
      %351 = vmatmul.mubr.f32.gmra.mrb[0].mxu0 %v249
      %v352 = vpop.f32.mrb[0].mxu0
      %v353 = vadd.f32 0.0, %v352
      %v354 = vpop.f32.mrb[0].mxu0
      %355 = vmatprep.mubr.f32.mxu0 0.0
      %356 = vmatmul.mubr.f32.gmra.mrb[0].mxu0 %v252
      %v357 = vpop.f32.mrb[0].mxu0
      %v358 = vadd.f32 0.0, %v357
      %v359 = vpop.f32.mrb[0].mxu0
      %360 = vmatprep.mubr.f32.mxu0 0.0
      %361 = vmatmul.mubr.f32.gmra.mrb[0].mxu0 %v255
      %v362 = vpop.f32.mrb[0].mxu0
      %v363 = vadd.f32 0.0, %v362
      %v364 = vpop.f32.mrb[0].mxu0
      %365 = vmatprep.mubr.f32.mxu0 0.0
      %366 = vmatmul.mubr.f32.gmra.mrb[0].mxu0 %v258
      %v367 = vpop.f32.mrb[0].mxu0
      %v368 = vadd.f32 0.0, %v367
      %v369 = vpop.f32.mrb[0].mxu0
      %370 = vmatprep.mubr.f32.mxu0 0.0
      %371 = vmatmul.mubr.f32.gmra.mrb[0].mxu0 %v261
      %v372 = vpop.f32.mrb[0].mxu0
      %v373 = vadd.f32 0.0, %v372
      %v374 = vpop.f32.mrb[0].mxu0
      %375 = vmatprep.mubr.f32.mxu0 0.0
      %376 = vmatmul.mubr.f32.gmra.mrb[0].mxu0 %v264
      %v377 = vpop.f32.mrb[0].mxu0
      %v378 = vadd.f32 0.0, %v377
      %v379 = vpop.f32.mrb[0].mxu0
      %380 = vmatprep.mubr.f32.mxu0 0.0
      %381 = vmatmul.mubr.f32.gmra.mrb[0].mxu0 %v267
      %v382 = vpop.f32.mrb[0].mxu0
      %v383 = vadd.f32 0.0, %v382
      %v384 = vpop.f32.mrb[0].mxu0
      %385 = vmatprep.mubr.f32.mxu0 0.0
      %386 = vmatmul.mubr.f32.gmra.mrb[0].mxu0 %v270
      %v387 = vpop.f32.mrb[0].mxu0
      %v388 = vadd.f32 0.0, %v387
      %v389 = vpop.f32.mrb[0].mxu0
      %390 = vmatprep.mubr.f32.mxu0 0.0
      %391 = vmatmul.mubr.f32.gmra.mrb[0].mxu0 %v273
      %v392 = vpop.f32.mrb[0].mxu0
      %v393 = vadd.f32 0.0, %v392
      %v394 = vpop.f32.mrb[0].mxu0
      %395 = vmatprep.mubr.f32.mxu0 0.0
      %396 = vmatmul.mubr.f32.gmra.mrb[0].mxu0 %v276
      %v397 = vpop.f32.mrb[0].mxu0
      %v398 = vadd.f32 0.0, %v397
      %v399 = vpop.f32.mrb[0].mxu0
      %400 = vmatprep.mubr.f32.mxu0 0.0
      %401 = vmatmul.mubr.f32.gmra.mrb[0].mxu0 %v279
      %v402 = vpop.f32.mrb[0].mxu0
      %v403 = vadd.f32 0.0, %v402
      %v404 = vpop.f32.mrb[0].mxu0
      %405 = vdwg.mxu0
      %v406 = vmul.f32 %v348, %v193
      %v407 = vmul.f32 %v353, %v194
      %v408 = vadd.f32 %v406, %v407
      %v409 = vrot.slane %v408, 4
      %v410 = vadd.f32 %v408, %v409
      %v411 = vrot.slane %v410, 2
      %v412 = vadd.f32 %v410, %v411
      %v413 = vrot.slane %v412, 1
      %v414 = vadd.f32 %v412, %v413
      %v415 = vmul.f32 %v358, %v193
      %v416 = vmul.f32 %v363, %v194
      %v417 = vadd.f32 %v415, %v416
      %v418 = vrot.slane %v417, 4
      %v419 = vadd.f32 %v417, %v418
      %v420 = vrot.slane %v419, 2
      %v421 = vadd.f32 %v419, %v420
      %v422 = vrot.slane %v421, 1
      %v423 = vadd.f32 %v421, %v422
      %v424 = vmul.f32 %v368, %v414
      %v425 = vmul.f32 %v373, %v414
      %v426 = vmul.f32 %v378, %v414
      %v427 = vmul.f32 %v383, %v414
      %v428 = vmul.f32 %v388, %v423
      %v429 = vmul.f32 %v393, %v423
      %v430 = vmul.f32 %v398, %v423
      %v431 = vmul.f32 %v403, %v423
      %v432 = vmul.f32 %v424, 0.5
      %v433 = vmul.f32 %v425, 0.5
      %v434 = vmul.f32 %v426, 0.5
      %v435 = vmul.f32 %v427, 0.5
      %v436 = vtanh.pop %v432
      %v437 = vtanh.pop %v433
      %v438 = vtanh.pop %v434
      %v439 = vtanh.pop %v435
      %v440 = vmul.f32 %v436, 0.5
      %v441 = vmul.f32 %v437, 0.5
      %v442 = vmul.f32 %v438, 0.5
      %v443 = vmul.f32 %v439, 0.5
      %v444 = vadd.f32 %v440, 0.5
      %v445 = vadd.f32 %v441, 0.5
      %v446 = vadd.f32 %v442, 0.5
      %v447 = vadd.f32 %v443, 0.5
      %v448 = vmul.f32 %v424, %v444
      %v449 = vmul.f32 %v425, %v445
      %v450 = vmul.f32 %v426, %v446
      %v451 = vmul.f32 %v427, %v447
      %v452 = vmul.f32 %v428, 0.5
      %v453 = vmul.f32 %v429, 0.5
      %v454 = vmul.f32 %v430, 0.5
      %v455 = vmul.f32 %v431, 0.5
      %v456 = vtanh.pop %v452
      %v457 = vtanh.pop %v453
      %v458 = vtanh.pop %v454
      %v459 = vtanh.pop %v455
      %v460 = vmul.f32 %v456, 0.5
      %v461 = vmul.f32 %v457, 0.5
      %v462 = vmul.f32 %v458, 0.5
      %v463 = vmul.f32 %v459, 0.5
      %v464 = vadd.f32 %v460, 0.5
      %v465 = vadd.f32 %v461, 0.5
      %v466 = vadd.f32 %v462, 0.5
      %v467 = vadd.f32 %v463, 0.5
      %v468 = vmul.f32 %v428, %v464
      %v469 = vmul.f32 %v429, %v465
      %v470 = vmul.f32 %v430, %v466
      %v471 = vmul.f32 %v431, %v467
      %vm472 = vcmask 130048
      %v474 = vsel %vm472, %v448, 0
      %v477 = vsel %vm472, %v449, 0
      %v480 = vsel %vm472, %v450, 0
      %v483 = vsel %vm472, %v451, 0
      %485 = vmatprep.subr.mxu0 %v196
      %486 = vmatpush1.msra.mxu0 %v195
      %487 = vmatprep.subr.mxu0 %v198
      %488 = vmatpush1.msra.mxu0 %v197
      %489 = vmatprep.subr.mxu0 0.0
      %490 = vmatpush1.msra.mxu0 0.0
      %491 = vmatprep.subr.mxu0 0.0
      %492 = vmatpush1.msra.mxu0 0.0
      %493 = vmatprep.subr.mxu0 0.0
      %494 = vmatpush1.msra.mxu0 0.0
      %495 = vmatprep.subr.mxu0 0.0
      %496 = vmatpush1.msra.mxu0 0.0
      %497 = vmatprep.subr.mxu0 0.0
      %498 = vmatpush1.msra.mxu0 0.0
      %499 = vmatprep.subr.mxu0 0.0
      %500 = vmatpush1.msra.mxu0 0.0
      %501 = vmatprep.subr.mxu0 0.0
      %502 = vmatpush1.msra.mxu0 0.0
      %503 = vmatprep.subr.mxu0 0.0
      %504 = vmatpush1.msra.mxu0 0.0
      %505 = vmatprep.subr.mxu0 0.0
      %506 = vmatpush1.msra.mxu0 0.0
      %507 = vmatprep.subr.mxu0 0.0
      %508 = vmatpush1.msra.mxu0 0.0
      %509 = vmatprep.subr.mxu0 0.0
      %510 = vmatpush1.msra.mxu0 0.0
      %511 = vmatprep.subr.mxu0 0.0
      %512 = vmatpush1.msra.mxu0 0.0
      %513 = vmatprep.subr.mxu0 0.0
      %514 = vmatpush1.msra.mxu0 0.0
      %515 = vmatprep.subr.mxu0 0.0
      %516 = vmatpush1.msra.mxu0 0.0
      %517 = vmatprep.subr.mxu0 0.0
      %518 = vmatpush1.msra.mxu0 0.0
      %519 = vmatprep.subr.mxu0 0.0
      %520 = vmatpush1.msra.mxu0 0.0
      %521 = vmatprep.subr.mxu0 0.0
      %522 = vmatpush1.msra.mxu0 0.0
      %523 = vmatprep.subr.mxu0 0.0
      %524 = vmatpush1.msra.mxu0 0.0
      %525 = vmatprep.subr.mxu0 0.0
      %526 = vmatpush1.msra.mxu0 0.0
      %527 = vmatprep.subr.mxu0 0.0
      %528 = vmatpush1.msra.mxu0 0.0
      %529 = vmatprep.subr.mxu0 0.0
      %530 = vmatpush1.msra.mxu0 0.0
      %531 = vmatprep.subr.mxu0 0.0
      %532 = vmatpush1.msra.mxu0 0.0
      %533 = vmatprep.subr.mxu0 0.0
      %534 = vmatpush1.msra.mxu0 0.0
      %535 = vmatprep.subr.mxu0 0.0
      %536 = vmatpush1.msra.mxu0 0.0
      %537 = vmatprep.subr.mxu0 0.0
      %538 = vmatpush1.msra.mxu0 0.0
      %539 = vmatprep.subr.mxu0 0.0
      %540 = vmatpush1.msra.mxu0 0.0
      %541 = vmatprep.subr.mxu0 0.0
      %542 = vmatpush1.msra.mxu0 0.0
      %543 = vmatprep.subr.mxu0 0.0
      %544 = vmatpush1.msra.mxu0 0.0
      %545 = vmatprep.subr.mxu0 0.0
      %546 = vmatpush1.msra.mxu0 0.0
      %547 = vmatprep.subr.mxu0 0.0
      %548 = vmatpush1.msra.mxu0 0.0
      %549 = vmatprep.mubr.f32.mxu0 0.0
      %550 = vmatmul.mubr.f32.gmra.mrb[0].mxu0 %v474
      %v551 = vpop.f32.mrb[0].mxu0
      %v552 = vadd.f32 0.0, %v551
      %v553 = vpop.f32.mrb[0].mxu0
      %v554 = vadd.f32 0.0, %v553
      %555 = vmatprep.mubr.f32.mxu0 0.0
      %556 = vmatmul.mubr.f32.gmra.mrb[0].mxu0 %v477
      %v557 = vpop.f32.mrb[0].mxu0
      %v558 = vadd.f32 0.0, %v557
      %v559 = vpop.f32.mrb[0].mxu0
      %v560 = vadd.f32 0.0, %v559
      %561 = vmatprep.mubr.f32.mxu0 0.0
      %562 = vmatmul.mubr.f32.gmra.mrb[0].mxu0 %v480
      %v563 = vpop.f32.mrb[0].mxu0
      %v564 = vadd.f32 0.0, %v563
      %v565 = vpop.f32.mrb[0].mxu0
      %v566 = vadd.f32 0.0, %v565
      %567 = vmatprep.mubr.f32.mxu0 0.0
      %568 = vmatmul.mubr.f32.gmra.mrb[0].mxu0 %v483
      %v569 = vpop.f32.mrb[0].mxu0
      %v570 = vadd.f32 0.0, %v569
      %v571 = vpop.f32.mrb[0].mxu0
      %v572 = vadd.f32 0.0, %v571
      %573 = vdwg.mxu0
      %v575 = vsel %vm472, %v468, 0
      %v578 = vsel %vm472, %v469, 0
      %v581 = vsel %vm472, %v470, 0
      %v584 = vsel %vm472, %v471, 0
      %586 = vmatprep.subr.mxu0 %v200
      %587 = vmatpush1.msra.mxu0 %v199
      %588 = vmatprep.subr.mxu0 %v202
      %589 = vmatpush1.msra.mxu0 %v201
      %590 = vmatprep.subr.mxu0 0.0
      %591 = vmatpush1.msra.mxu0 0.0
      %592 = vmatprep.subr.mxu0 0.0
      %593 = vmatpush1.msra.mxu0 0.0
      %594 = vmatprep.subr.mxu0 0.0
      %595 = vmatpush1.msra.mxu0 0.0
      %596 = vmatprep.subr.mxu0 0.0
      %597 = vmatpush1.msra.mxu0 0.0
      %598 = vmatprep.subr.mxu0 0.0
      %599 = vmatpush1.msra.mxu0 0.0
      %600 = vmatprep.subr.mxu0 0.0
      %601 = vmatpush1.msra.mxu0 0.0
      %602 = vmatprep.subr.mxu0 0.0
      %603 = vmatpush1.msra.mxu0 0.0
      %604 = vmatprep.subr.mxu0 0.0
      %605 = vmatpush1.msra.mxu0 0.0
      %606 = vmatprep.subr.mxu0 0.0
      %607 = vmatpush1.msra.mxu0 0.0
      %608 = vmatprep.subr.mxu0 0.0
      %609 = vmatpush1.msra.mxu0 0.0
      %610 = vmatprep.subr.mxu0 0.0
      %611 = vmatpush1.msra.mxu0 0.0
      %612 = vmatprep.subr.mxu0 0.0
      %613 = vmatpush1.msra.mxu0 0.0
      %614 = vmatprep.subr.mxu0 0.0
      %615 = vmatpush1.msra.mxu0 0.0
      %616 = vmatprep.subr.mxu0 0.0
      %617 = vmatpush1.msra.mxu0 0.0
      %618 = vmatprep.subr.mxu0 0.0
      %619 = vmatpush1.msra.mxu0 0.0
      %620 = vmatprep.subr.mxu0 0.0
      %621 = vmatpush1.msra.mxu0 0.0
      %622 = vmatprep.subr.mxu0 0.0
      %623 = vmatpush1.msra.mxu0 0.0
      %624 = vmatprep.subr.mxu0 0.0
      %625 = vmatpush1.msra.mxu0 0.0
      %626 = vmatprep.subr.mxu0 0.0
      %627 = vmatpush1.msra.mxu0 0.0
      %628 = vmatprep.subr.mxu0 0.0
      %629 = vmatpush1.msra.mxu0 0.0
      %630 = vmatprep.subr.mxu0 0.0
      %631 = vmatpush1.msra.mxu0 0.0
      %632 = vmatprep.subr.mxu0 0.0
      %633 = vmatpush1.msra.mxu0 0.0
      %634 = vmatprep.subr.mxu0 0.0
      %635 = vmatpush1.msra.mxu0 0.0
      %636 = vmatprep.subr.mxu0 0.0
      %637 = vmatpush1.msra.mxu0 0.0
      %638 = vmatprep.subr.mxu0 0.0
      %639 = vmatpush1.msra.mxu0 0.0
      %640 = vmatprep.subr.mxu0 0.0
      %641 = vmatpush1.msra.mxu0 0.0
      %642 = vmatprep.subr.mxu0 0.0
      %643 = vmatpush1.msra.mxu0 0.0
      %644 = vmatprep.subr.mxu0 0.0
      %645 = vmatpush1.msra.mxu0 0.0
      %646 = vmatprep.subr.mxu0 0.0
      %647 = vmatpush1.msra.mxu0 0.0
      %648 = vmatprep.subr.mxu0 0.0
      %649 = vmatpush1.msra.mxu0 0.0
      %650 = vmatprep.mubr.f32.mxu0 0.0
      %651 = vmatmul.mubr.f32.gmra.mrb[0].mxu0 %v575
      %v652 = vpop.f32.mrb[0].mxu0
      %v653 = vadd.f32 0.0, %v652
      %v654 = vpop.f32.mrb[0].mxu0
      %v655 = vadd.f32 0.0, %v654
      %656 = vmatprep.mubr.f32.mxu0 0.0
      %657 = vmatmul.mubr.f32.gmra.mrb[0].mxu0 %v578
      %v658 = vpop.f32.mrb[0].mxu0
      %v659 = vadd.f32 0.0, %v658
      %v660 = vpop.f32.mrb[0].mxu0
      %v661 = vadd.f32 0.0, %v660
      %662 = vmatprep.mubr.f32.mxu0 0.0
      %663 = vmatmul.mubr.f32.gmra.mrb[0].mxu0 %v581
      %v664 = vpop.f32.mrb[0].mxu0
      %v665 = vadd.f32 0.0, %v664
      %v666 = vpop.f32.mrb[0].mxu0
      %v667 = vadd.f32 0.0, %v666
      %668 = vmatprep.mubr.f32.mxu0 0.0
      %669 = vmatmul.mubr.f32.gmra.mrb[0].mxu0 %v584
      %v670 = vpop.f32.mrb[0].mxu0
      %v671 = vadd.f32 0.0, %v670
      %v672 = vpop.f32.mrb[0].mxu0
      %v673 = vadd.f32 0.0, %v672
      %674 = vdwg.mxu0
      %v675 = vmul.f32 %v552, %v653
      %v676 = vmul.f32 %v554, %v655
      %v677 = vmul.f32 %v558, %v659
      %v678 = vmul.f32 %v560, %v661
      %v679 = vmul.f32 %v564, %v665
      %v680 = vmul.f32 %v566, %v667
      %v681 = vmul.f32 %v570, %v671
      %v682 = vmul.f32 %v572, %v673
      %v683 = vadd.f32 %v675, 0.0
      %v684 = vadd.f32 %v676, 0.0
      %v685 = vadd.f32 %v677, 0.0
      %v686 = vadd.f32 %v678, 0.0
      %v687 = vadd.f32 %v679, 0.0
      %v688 = vadd.f32 %v680, 0.0
      %v689 = vadd.f32 %v681, 0.0
      %v690 = vadd.f32 %v682, 0.0
      %691 = vrot.lane.b32.xlu0 %v448, 112
      %v692 = vpop.permute.xlu0 %691
      %693 = vrot.lane.b32.xlu0 %v449, 112
      %v694 = vpop.permute.xlu0 %693
      %695 = vrot.lane.b32.xlu0 %v450, 112
      %v696 = vpop.permute.xlu0 %695
      %697 = vrot.lane.b32.xlu0 %v451, 112
      %v698 = vpop.permute.xlu0 %697
      %v699 = vsel %vm472, %v692, 0
      %v701 = vsel %vm472, %v694, 0
      %v703 = vsel %vm472, %v696, 0
      %v705 = vsel %vm472, %v698, 0
      %707 = vmatprep.subr.mxu0 %v196
      %708 = vmatpush1.msra.mxu0 %v195
      %709 = vmatprep.subr.mxu0 %v198
      %710 = vmatpush1.msra.mxu0 %v197
      %711 = vmatprep.subr.mxu0 0.0
      %712 = vmatpush1.msra.mxu0 0.0
      %713 = vmatprep.subr.mxu0 0.0
      %714 = vmatpush1.msra.mxu0 0.0
      %715 = vmatprep.subr.mxu0 0.0
      %716 = vmatpush1.msra.mxu0 0.0
      %717 = vmatprep.subr.mxu0 0.0
      %718 = vmatpush1.msra.mxu0 0.0
      %719 = vmatprep.subr.mxu0 0.0
      %720 = vmatpush1.msra.mxu0 0.0
      %721 = vmatprep.subr.mxu0 0.0
      %722 = vmatpush1.msra.mxu0 0.0
      %723 = vmatprep.subr.mxu0 0.0
      %724 = vmatpush1.msra.mxu0 0.0
      %725 = vmatprep.subr.mxu0 0.0
      %726 = vmatpush1.msra.mxu0 0.0
      %727 = vmatprep.subr.mxu0 0.0
      %728 = vmatpush1.msra.mxu0 0.0
      %729 = vmatprep.subr.mxu0 0.0
      %730 = vmatpush1.msra.mxu0 0.0
      %731 = vmatprep.subr.mxu0 0.0
      %732 = vmatpush1.msra.mxu0 0.0
      %733 = vmatprep.subr.mxu0 0.0
      %734 = vmatpush1.msra.mxu0 0.0
      %735 = vmatprep.subr.mxu0 0.0
      %736 = vmatpush1.msra.mxu0 0.0
      %737 = vmatprep.subr.mxu0 0.0
      %738 = vmatpush1.msra.mxu0 0.0
      %739 = vmatprep.subr.mxu0 0.0
      %740 = vmatpush1.msra.mxu0 0.0
      %741 = vmatprep.subr.mxu0 0.0
      %742 = vmatpush1.msra.mxu0 0.0
      %743 = vmatprep.subr.mxu0 0.0
      %744 = vmatpush1.msra.mxu0 0.0
      %745 = vmatprep.subr.mxu0 0.0
      %746 = vmatpush1.msra.mxu0 0.0
      %747 = vmatprep.subr.mxu0 0.0
      %748 = vmatpush1.msra.mxu0 0.0
      %749 = vmatprep.subr.mxu0 0.0
      %750 = vmatpush1.msra.mxu0 0.0
      %751 = vmatprep.subr.mxu0 0.0
      %752 = vmatpush1.msra.mxu0 0.0
      %753 = vmatprep.subr.mxu0 0.0
      %754 = vmatpush1.msra.mxu0 0.0
      %755 = vmatprep.subr.mxu0 0.0
      %756 = vmatpush1.msra.mxu0 0.0
      %757 = vmatprep.subr.mxu0 0.0
      %758 = vmatpush1.msra.mxu0 0.0
      %759 = vmatprep.subr.mxu0 0.0
      %760 = vmatpush1.msra.mxu0 0.0
      %761 = vmatprep.subr.mxu0 0.0
      %762 = vmatpush1.msra.mxu0 0.0
      %763 = vmatprep.subr.mxu0 0.0
      %764 = vmatpush1.msra.mxu0 0.0
      %765 = vmatprep.subr.mxu0 0.0
      %766 = vmatpush1.msra.mxu0 0.0
      %767 = vmatprep.subr.mxu0 0.0
      %768 = vmatpush1.msra.mxu0 0.0
      %769 = vmatprep.subr.mxu0 0.0
      %770 = vmatpush1.msra.mxu0 0.0
      %771 = vmatprep.mubr.f32.mxu0 0.0
      %772 = vmatmul.mubr.f32.gmra.mrb[0].mxu0 %v699
      %v773 = vpop.f32.mrb[0].mxu0
      %v774 = vadd.f32 0.0, %v773
      %v775 = vpop.f32.mrb[0].mxu0
      %v776 = vadd.f32 0.0, %v775
      %777 = vmatprep.mubr.f32.mxu0 0.0
      %778 = vmatmul.mubr.f32.gmra.mrb[0].mxu0 %v701
      %v779 = vpop.f32.mrb[0].mxu0
      %v780 = vadd.f32 0.0, %v779
      %v781 = vpop.f32.mrb[0].mxu0
      %v782 = vadd.f32 0.0, %v781
      %783 = vmatprep.mubr.f32.mxu0 0.0
      %784 = vmatmul.mubr.f32.gmra.mrb[0].mxu0 %v703
      %v785 = vpop.f32.mrb[0].mxu0
      %v786 = vadd.f32 0.0, %v785
      %v787 = vpop.f32.mrb[0].mxu0
      %v788 = vadd.f32 0.0, %v787
      %789 = vmatprep.mubr.f32.mxu0 0.0
      %790 = vmatmul.mubr.f32.gmra.mrb[0].mxu0 %v705
      %v791 = vpop.f32.mrb[0].mxu0
      %v792 = vadd.f32 0.0, %v791
      %v793 = vpop.f32.mrb[0].mxu0
      %v794 = vadd.f32 0.0, %v793
      %795 = vdwg.mxu0
      %796 = vrot.lane.b32.xlu0 %v468, 112
      %v797 = vpop.permute.xlu0 %796
      %798 = vrot.lane.b32.xlu0 %v469, 112
      %v799 = vpop.permute.xlu0 %798
      %800 = vrot.lane.b32.xlu0 %v470, 112
      %v801 = vpop.permute.xlu0 %800
      %802 = vrot.lane.b32.xlu0 %v471, 112
      %v803 = vpop.permute.xlu0 %802
      %v804 = vsel %vm472, %v797, 0
      %v806 = vsel %vm472, %v799, 0
      %v808 = vsel %vm472, %v801, 0
      %v810 = vsel %vm472, %v803, 0
      %812 = vmatprep.subr.mxu0 %v200
      %813 = vmatpush1.msra.mxu0 %v199
      %814 = vmatprep.subr.mxu0 %v202
      %815 = vmatpush1.msra.mxu0 %v201
      %816 = vmatprep.subr.mxu0 0.0
      %817 = vmatpush1.msra.mxu0 0.0
      %818 = vmatprep.subr.mxu0 0.0
      %819 = vmatpush1.msra.mxu0 0.0
      %820 = vmatprep.subr.mxu0 0.0
      %821 = vmatpush1.msra.mxu0 0.0
      %822 = vmatprep.subr.mxu0 0.0
      %823 = vmatpush1.msra.mxu0 0.0
      %824 = vmatprep.subr.mxu0 0.0
      %825 = vmatpush1.msra.mxu0 0.0
      %826 = vmatprep.subr.mxu0 0.0
      %827 = vmatpush1.msra.mxu0 0.0
      %828 = vmatprep.subr.mxu0 0.0
      %829 = vmatpush1.msra.mxu0 0.0
      %830 = vmatprep.subr.mxu0 0.0
      %831 = vmatpush1.msra.mxu0 0.0
      %832 = vmatprep.subr.mxu0 0.0
      %833 = vmatpush1.msra.mxu0 0.0
      %834 = vmatprep.subr.mxu0 0.0
      %835 = vmatpush1.msra.mxu0 0.0
      %836 = vmatprep.subr.mxu0 0.0
      %837 = vmatpush1.msra.mxu0 0.0
      %838 = vmatprep.subr.mxu0 0.0
      %839 = vmatpush1.msra.mxu0 0.0
      %840 = vmatprep.subr.mxu0 0.0
      %841 = vmatpush1.msra.mxu0 0.0
      %842 = vmatprep.subr.mxu0 0.0
      %843 = vmatpush1.msra.mxu0 0.0
      %844 = vmatprep.subr.mxu0 0.0
      %845 = vmatpush1.msra.mxu0 0.0
      %846 = vmatprep.subr.mxu0 0.0
      %847 = vmatpush1.msra.mxu0 0.0
      %848 = vmatprep.subr.mxu0 0.0
      %849 = vmatpush1.msra.mxu0 0.0
      %850 = vmatprep.subr.mxu0 0.0
      %851 = vmatpush1.msra.mxu0 0.0
      %852 = vmatprep.subr.mxu0 0.0
      %853 = vmatpush1.msra.mxu0 0.0
      %854 = vmatprep.subr.mxu0 0.0
      %855 = vmatpush1.msra.mxu0 0.0
      %856 = vmatprep.subr.mxu0 0.0
      %857 = vmatpush1.msra.mxu0 0.0
      %858 = vmatprep.subr.mxu0 0.0
      %859 = vmatpush1.msra.mxu0 0.0
      %860 = vmatprep.subr.mxu0 0.0
      %861 = vmatpush1.msra.mxu0 0.0
      %862 = vmatprep.subr.mxu0 0.0
      %863 = vmatpush1.msra.mxu0 0.0
      %864 = vmatprep.subr.mxu0 0.0
      %865 = vmatpush1.msra.mxu0 0.0
      %866 = vmatprep.subr.mxu0 0.0
      %867 = vmatpush1.msra.mxu0 0.0
      %868 = vmatprep.subr.mxu0 0.0
      %869 = vmatpush1.msra.mxu0 0.0
      %870 = vmatprep.subr.mxu0 0.0
      %871 = vmatpush1.msra.mxu0 0.0
      %872 = vmatprep.subr.mxu0 0.0
      %873 = vmatpush1.msra.mxu0 0.0
      %874 = vmatprep.subr.mxu0 0.0
      %875 = vmatpush1.msra.mxu0 0.0
      %876 = vmatprep.mubr.f32.mxu0 0.0
      %877 = vmatmul.mubr.f32.gmra.mrb[0].mxu0 %v804
      %v878 = vpop.f32.mrb[0].mxu0
      %v879 = vadd.f32 0.0, %v878
      %v880 = vpop.f32.mrb[0].mxu0
      %v881 = vadd.f32 0.0, %v880
      %882 = vmatprep.mubr.f32.mxu0 0.0
      %883 = vmatmul.mubr.f32.gmra.mrb[0].mxu0 %v806
      %v884 = vpop.f32.mrb[0].mxu0
      %v885 = vadd.f32 0.0, %v884
      %v886 = vpop.f32.mrb[0].mxu0
      %v887 = vadd.f32 0.0, %v886
      %888 = vmatprep.mubr.f32.mxu0 0.0
      %889 = vmatmul.mubr.f32.gmra.mrb[0].mxu0 %v808
      %v890 = vpop.f32.mrb[0].mxu0
      %v891 = vadd.f32 0.0, %v890
      %v892 = vpop.f32.mrb[0].mxu0
      %v893 = vadd.f32 0.0, %v892
      %894 = vmatprep.mubr.f32.mxu0 0.0
      %895 = vmatmul.mubr.f32.gmra.mrb[0].mxu0 %v810
      %v896 = vpop.f32.mrb[0].mxu0
      %v897 = vadd.f32 0.0, %v896
      %v898 = vpop.f32.mrb[0].mxu0
      %v899 = vadd.f32 0.0, %v898
      %900 = vdwg.mxu0
      %v901 = vmul.f32 %v774, %v879
      %v902 = vmul.f32 %v776, %v881
      %v903 = vmul.f32 %v780, %v885
      %v904 = vmul.f32 %v782, %v887
      %v905 = vmul.f32 %v786, %v891
      %v906 = vmul.f32 %v788, %v893
      %v907 = vmul.f32 %v792, %v897
      %v908 = vmul.f32 %v794, %v899
      %v909 = vadd.f32 %v901, 0.0
      %v910 = vadd.f32 %v902, 0.0
      %v911 = vadd.f32 %v903, 0.0
      %v912 = vadd.f32 %v904, 0.0
      %v913 = vadd.f32 %v905, 0.0
      %v914 = vadd.f32 %v906, 0.0
      %v915 = vadd.f32 %v907, 0.0
      %v916 = vadd.f32 %v908, 0.0
      %917 = vrot.lane.b32.xlu0 %v448, 96
      %v918 = vpop.permute.xlu0 %917
      %919 = vrot.lane.b32.xlu0 %v449, 96
      %v920 = vpop.permute.xlu0 %919
      %921 = vrot.lane.b32.xlu0 %v450, 96
      %v922 = vpop.permute.xlu0 %921
      %923 = vrot.lane.b32.xlu0 %v451, 96
      %v924 = vpop.permute.xlu0 %923
      %v925 = vsel %vm472, %v918, 0
      %v927 = vsel %vm472, %v920, 0
      %v929 = vsel %vm472, %v922, 0
      %v931 = vsel %vm472, %v924, 0
      %933 = vmatprep.subr.mxu0 %v196
      %934 = vmatpush1.msra.mxu0 %v195
      %935 = vmatprep.subr.mxu0 %v198
      %936 = vmatpush1.msra.mxu0 %v197
      %937 = vmatprep.subr.mxu0 0.0
      %938 = vmatpush1.msra.mxu0 0.0
      %939 = vmatprep.subr.mxu0 0.0
      %940 = vmatpush1.msra.mxu0 0.0
      %941 = vmatprep.subr.mxu0 0.0
      %942 = vmatpush1.msra.mxu0 0.0
      %943 = vmatprep.subr.mxu0 0.0
      %944 = vmatpush1.msra.mxu0 0.0
      %945 = vmatprep.subr.mxu0 0.0
      %946 = vmatpush1.msra.mxu0 0.0
      %947 = vmatprep.subr.mxu0 0.0
      %948 = vmatpush1.msra.mxu0 0.0
      %949 = vmatprep.subr.mxu0 0.0
      %950 = vmatpush1.msra.mxu0 0.0
      %951 = vmatprep.subr.mxu0 0.0
      %952 = vmatpush1.msra.mxu0 0.0
      %953 = vmatprep.subr.mxu0 0.0
      %954 = vmatpush1.msra.mxu0 0.0
      %955 = vmatprep.subr.mxu0 0.0
      %956 = vmatpush1.msra.mxu0 0.0
      %957 = vmatprep.subr.mxu0 0.0
      %958 = vmatpush1.msra.mxu0 0.0
      %959 = vmatprep.subr.mxu0 0.0
      %960 = vmatpush1.msra.mxu0 0.0
      %961 = vmatprep.subr.mxu0 0.0
      %962 = vmatpush1.msra.mxu0 0.0
      %963 = vmatprep.subr.mxu0 0.0
      %964 = vmatpush1.msra.mxu0 0.0
      %965 = vmatprep.subr.mxu0 0.0
      %966 = vmatpush1.msra.mxu0 0.0
      %967 = vmatprep.subr.mxu0 0.0
      %968 = vmatpush1.msra.mxu0 0.0
      %969 = vmatprep.subr.mxu0 0.0
      %970 = vmatpush1.msra.mxu0 0.0
      %971 = vmatprep.subr.mxu0 0.0
      %972 = vmatpush1.msra.mxu0 0.0
      %973 = vmatprep.subr.mxu0 0.0
      %974 = vmatpush1.msra.mxu0 0.0
      %975 = vmatprep.subr.mxu0 0.0
      %976 = vmatpush1.msra.mxu0 0.0
      %977 = vmatprep.subr.mxu0 0.0
      %978 = vmatpush1.msra.mxu0 0.0
      %979 = vmatprep.subr.mxu0 0.0
      %980 = vmatpush1.msra.mxu0 0.0
      %981 = vmatprep.subr.mxu0 0.0
      %982 = vmatpush1.msra.mxu0 0.0
      %983 = vmatprep.subr.mxu0 0.0
      %984 = vmatpush1.msra.mxu0 0.0
      %985 = vmatprep.subr.mxu0 0.0
      %986 = vmatpush1.msra.mxu0 0.0
      %987 = vmatprep.subr.mxu0 0.0
      %988 = vmatpush1.msra.mxu0 0.0
      %989 = vmatprep.subr.mxu0 0.0
      %990 = vmatpush1.msra.mxu0 0.0
      %991 = vmatprep.subr.mxu0 0.0
      %992 = vmatpush1.msra.mxu0 0.0
      %993 = vmatprep.subr.mxu0 0.0
      %994 = vmatpush1.msra.mxu0 0.0
      %995 = vmatprep.subr.mxu0 0.0
      %996 = vmatpush1.msra.mxu0 0.0
      %997 = vmatprep.mubr.f32.mxu0 0.0
      %998 = vmatmul.mubr.f32.gmra.mrb[0].mxu0 %v925
      %v999 = vpop.f32.mrb[0].mxu0
      %v1000 = vadd.f32 0.0, %v999
      %v1001 = vpop.f32.mrb[0].mxu0
      %v1002 = vadd.f32 0.0, %v1001
      %1003 = vmatprep.mubr.f32.mxu0 0.0
      %1004 = vmatmul.mubr.f32.gmra.mrb[0].mxu0 %v927
      %v1005 = vpop.f32.mrb[0].mxu0
      %v1006 = vadd.f32 0.0, %v1005
      %v1007 = vpop.f32.mrb[0].mxu0
      %v1008 = vadd.f32 0.0, %v1007
      %1009 = vmatprep.mubr.f32.mxu0 0.0
      %1010 = vmatmul.mubr.f32.gmra.mrb[0].mxu0 %v929
      %v1011 = vpop.f32.mrb[0].mxu0
      %v1012 = vadd.f32 0.0, %v1011
      %v1013 = vpop.f32.mrb[0].mxu0
      %v1014 = vadd.f32 0.0, %v1013
      %1015 = vmatprep.mubr.f32.mxu0 0.0
      %1016 = vmatmul.mubr.f32.gmra.mrb[0].mxu0 %v931
      %v1017 = vpop.f32.mrb[0].mxu0
      %v1018 = vadd.f32 0.0, %v1017
      %v1019 = vpop.f32.mrb[0].mxu0
      %v1020 = vadd.f32 0.0, %v1019
      %1021 = vdwg.mxu0
      %1022 = vrot.lane.b32.xlu0 %v468, 96
      %v1023 = vpop.permute.xlu0 %1022
      %1024 = vrot.lane.b32.xlu0 %v469, 96
      %v1025 = vpop.permute.xlu0 %1024
      %1026 = vrot.lane.b32.xlu0 %v470, 96
      %v1027 = vpop.permute.xlu0 %1026
      %1028 = vrot.lane.b32.xlu0 %v471, 96
      %v1029 = vpop.permute.xlu0 %1028
      %v1030 = vsel %vm472, %v1023, 0
      %v1032 = vsel %vm472, %v1025, 0
      %v1034 = vsel %vm472, %v1027, 0
      %v1036 = vsel %vm472, %v1029, 0
      %1038 = vmatprep.subr.mxu0 %v200
      %1039 = vmatpush1.msra.mxu0 %v199
      %1040 = vmatprep.subr.mxu0 %v202
      %1041 = vmatpush1.msra.mxu0 %v201
      %1042 = vmatprep.subr.mxu0 0.0
      %1043 = vmatpush1.msra.mxu0 0.0
      %1044 = vmatprep.subr.mxu0 0.0
      %1045 = vmatpush1.msra.mxu0 0.0
      %1046 = vmatprep.subr.mxu0 0.0
      %1047 = vmatpush1.msra.mxu0 0.0
      %1048 = vmatprep.subr.mxu0 0.0
      %1049 = vmatpush1.msra.mxu0 0.0
      %1050 = vmatprep.subr.mxu0 0.0
      %1051 = vmatpush1.msra.mxu0 0.0
      %1052 = vmatprep.subr.mxu0 0.0
      %1053 = vmatpush1.msra.mxu0 0.0
      %1054 = vmatprep.subr.mxu0 0.0
      %1055 = vmatpush1.msra.mxu0 0.0
      %1056 = vmatprep.subr.mxu0 0.0
      %1057 = vmatpush1.msra.mxu0 0.0
      %1058 = vmatprep.subr.mxu0 0.0
      %1059 = vmatpush1.msra.mxu0 0.0
      %1060 = vmatprep.subr.mxu0 0.0
      %1061 = vmatpush1.msra.mxu0 0.0
      %1062 = vmatprep.subr.mxu0 0.0
      %1063 = vmatpush1.msra.mxu0 0.0
      %1064 = vmatprep.subr.mxu0 0.0
      %1065 = vmatpush1.msra.mxu0 0.0
      %1066 = vmatprep.subr.mxu0 0.0
      %1067 = vmatpush1.msra.mxu0 0.0
      %1068 = vmatprep.subr.mxu0 0.0
      %1069 = vmatpush1.msra.mxu0 0.0
      %1070 = vmatprep.subr.mxu0 0.0
      %1071 = vmatpush1.msra.mxu0 0.0
      %1072 = vmatprep.subr.mxu0 0.0
      %1073 = vmatpush1.msra.mxu0 0.0
      %1074 = vmatprep.subr.mxu0 0.0
      %1075 = vmatpush1.msra.mxu0 0.0
      %1076 = vmatprep.subr.mxu0 0.0
      %1077 = vmatpush1.msra.mxu0 0.0
      %1078 = vmatprep.subr.mxu0 0.0
      %1079 = vmatpush1.msra.mxu0 0.0
      %1080 = vmatprep.subr.mxu0 0.0
      %1081 = vmatpush1.msra.mxu0 0.0
      %1082 = vmatprep.subr.mxu0 0.0
      %1083 = vmatpush1.msra.mxu0 0.0
      %1084 = vmatprep.subr.mxu0 0.0
      %1085 = vmatpush1.msra.mxu0 0.0
      %1086 = vmatprep.subr.mxu0 0.0
      %1087 = vmatpush1.msra.mxu0 0.0
      %1088 = vmatprep.subr.mxu0 0.0
      %1089 = vmatpush1.msra.mxu0 0.0
      %1090 = vmatprep.subr.mxu0 0.0
      %1091 = vmatpush1.msra.mxu0 0.0
      %1092 = vmatprep.subr.mxu0 0.0
      %1093 = vmatpush1.msra.mxu0 0.0
      %1094 = vmatprep.subr.mxu0 0.0
      %1095 = vmatpush1.msra.mxu0 0.0
      %1096 = vmatprep.subr.mxu0 0.0
      %1097 = vmatpush1.msra.mxu0 0.0
      %1098 = vmatprep.subr.mxu0 0.0
      %1099 = vmatpush1.msra.mxu0 0.0
      %1100 = vmatprep.subr.mxu0 0.0
      %1101 = vmatpush1.msra.mxu0 0.0
      %1102 = vmatprep.mubr.f32.mxu0 0.0
      %1103 = vmatmul.mubr.f32.gmra.mrb[0].mxu0 %v1030
      %v1104 = vpop.f32.mrb[0].mxu0
      %v1105 = vadd.f32 0.0, %v1104
      %v1106 = vpop.f32.mrb[0].mxu0
      %v1107 = vadd.f32 0.0, %v1106
      %1108 = vmatprep.mubr.f32.mxu0 0.0
      %1109 = vmatmul.mubr.f32.gmra.mrb[0].mxu0 %v1032
      %v1110 = vpop.f32.mrb[0].mxu0
      %v1111 = vadd.f32 0.0, %v1110
      %v1112 = vpop.f32.mrb[0].mxu0
      %v1113 = vadd.f32 0.0, %v1112
      %1114 = vmatprep.mubr.f32.mxu0 0.0
      %1115 = vmatmul.mubr.f32.gmra.mrb[0].mxu0 %v1034
      %v1116 = vpop.f32.mrb[0].mxu0
      %v1117 = vadd.f32 0.0, %v1116
      %v1118 = vpop.f32.mrb[0].mxu0
      %v1119 = vadd.f32 0.0, %v1118
      %1120 = vmatprep.mubr.f32.mxu0 0.0
      %1121 = vmatmul.mubr.f32.gmra.mrb[0].mxu0 %v1036
      %v1122 = vpop.f32.mrb[0].mxu0
      %v1123 = vadd.f32 0.0, %v1122
      %v1124 = vpop.f32.mrb[0].mxu0
      %v1125 = vadd.f32 0.0, %v1124
      %1126 = vdwg.mxu0
      %v1127 = vmul.f32 %v1000, %v1105
      %v1128 = vmul.f32 %v1002, %v1107
      %v1129 = vmul.f32 %v1006, %v1111
      %v1130 = vmul.f32 %v1008, %v1113
      %v1131 = vmul.f32 %v1012, %v1117
      %v1132 = vmul.f32 %v1014, %v1119
      %v1133 = vmul.f32 %v1018, %v1123
      %v1134 = vmul.f32 %v1020, %v1125
      %v1135 = vadd.f32 %v683, %v1127
      %v1136 = vadd.f32 %v684, %v1128
      %v1137 = vadd.f32 %v685, %v1129
      %v1138 = vadd.f32 %v686, %v1130
      %v1139 = vadd.f32 %v687, %v1131
      %v1140 = vadd.f32 %v688, %v1132
      %v1141 = vadd.f32 %v689, %v1133
      %v1142 = vadd.f32 %v690, %v1134
      %1143 = vrot.lane.b32.xlu0 %v448, 80
      %v1144 = vpop.permute.xlu0 %1143
      %1145 = vrot.lane.b32.xlu0 %v449, 80
      %v1146 = vpop.permute.xlu0 %1145
      %1147 = vrot.lane.b32.xlu0 %v450, 80
      %v1148 = vpop.permute.xlu0 %1147
      %1149 = vrot.lane.b32.xlu0 %v451, 80
      %v1150 = vpop.permute.xlu0 %1149
      %v1151 = vsel %vm472, %v1144, 0
      %v1153 = vsel %vm472, %v1146, 0
      %v1155 = vsel %vm472, %v1148, 0
      %v1157 = vsel %vm472, %v1150, 0
      %1159 = vmatprep.subr.mxu0 %v196
      %1160 = vmatpush1.msra.mxu0 %v195
      %1161 = vmatprep.subr.mxu0 %v198
      %1162 = vmatpush1.msra.mxu0 %v197
      %1163 = vmatprep.subr.mxu0 0.0
      %1164 = vmatpush1.msra.mxu0 0.0
      %1165 = vmatprep.subr.mxu0 0.0
      %1166 = vmatpush1.msra.mxu0 0.0
      %1167 = vmatprep.subr.mxu0 0.0
      %1168 = vmatpush1.msra.mxu0 0.0
      %1169 = vmatprep.subr.mxu0 0.0
      %1170 = vmatpush1.msra.mxu0 0.0
      %1171 = vmatprep.subr.mxu0 0.0
      %1172 = vmatpush1.msra.mxu0 0.0
      %1173 = vmatprep.subr.mxu0 0.0
      %1174 = vmatpush1.msra.mxu0 0.0
      %1175 = vmatprep.subr.mxu0 0.0
      %1176 = vmatpush1.msra.mxu0 0.0
      %1177 = vmatprep.subr.mxu0 0.0
      %1178 = vmatpush1.msra.mxu0 0.0
      %1179 = vmatprep.subr.mxu0 0.0
      %1180 = vmatpush1.msra.mxu0 0.0
      %1181 = vmatprep.subr.mxu0 0.0
      %1182 = vmatpush1.msra.mxu0 0.0
      %1183 = vmatprep.subr.mxu0 0.0
      %1184 = vmatpush1.msra.mxu0 0.0
      %1185 = vmatprep.subr.mxu0 0.0
      %1186 = vmatpush1.msra.mxu0 0.0
      %1187 = vmatprep.subr.mxu0 0.0
      %1188 = vmatpush1.msra.mxu0 0.0
      %1189 = vmatprep.subr.mxu0 0.0
      %1190 = vmatpush1.msra.mxu0 0.0
      %1191 = vmatprep.subr.mxu0 0.0
      %1192 = vmatpush1.msra.mxu0 0.0
      %1193 = vmatprep.subr.mxu0 0.0
      %1194 = vmatpush1.msra.mxu0 0.0
      %1195 = vmatprep.subr.mxu0 0.0
      %1196 = vmatpush1.msra.mxu0 0.0
      %1197 = vmatprep.subr.mxu0 0.0
      %1198 = vmatpush1.msra.mxu0 0.0
      %1199 = vmatprep.subr.mxu0 0.0
      %1200 = vmatpush1.msra.mxu0 0.0
      %1201 = vmatprep.subr.mxu0 0.0
      %1202 = vmatpush1.msra.mxu0 0.0
      %1203 = vmatprep.subr.mxu0 0.0
      %1204 = vmatpush1.msra.mxu0 0.0
      %1205 = vmatprep.subr.mxu0 0.0
      %1206 = vmatpush1.msra.mxu0 0.0
      %1207 = vmatprep.subr.mxu0 0.0
      %1208 = vmatpush1.msra.mxu0 0.0
      %1209 = vmatprep.subr.mxu0 0.0
      %1210 = vmatpush1.msra.mxu0 0.0
      %1211 = vmatprep.subr.mxu0 0.0
      %1212 = vmatpush1.msra.mxu0 0.0
      %1213 = vmatprep.subr.mxu0 0.0
      %1214 = vmatpush1.msra.mxu0 0.0
      %1215 = vmatprep.subr.mxu0 0.0
      %1216 = vmatpush1.msra.mxu0 0.0
      %1217 = vmatprep.subr.mxu0 0.0
      %1218 = vmatpush1.msra.mxu0 0.0
      %1219 = vmatprep.subr.mxu0 0.0
      %1220 = vmatpush1.msra.mxu0 0.0
      %1221 = vmatprep.subr.mxu0 0.0
      %1222 = vmatpush1.msra.mxu0 0.0
      %1223 = vmatprep.mubr.f32.mxu0 0.0
      %1224 = vmatmul.mubr.f32.gmra.mrb[0].mxu0 %v1151
      %v1225 = vpop.f32.mrb[0].mxu0
      %v1226 = vadd.f32 0.0, %v1225
      %v1227 = vpop.f32.mrb[0].mxu0
      %v1228 = vadd.f32 0.0, %v1227
      %1229 = vmatprep.mubr.f32.mxu0 0.0
      %1230 = vmatmul.mubr.f32.gmra.mrb[0].mxu0 %v1153
      %v1231 = vpop.f32.mrb[0].mxu0
      %v1232 = vadd.f32 0.0, %v1231
      %v1233 = vpop.f32.mrb[0].mxu0
      %v1234 = vadd.f32 0.0, %v1233
      %1235 = vmatprep.mubr.f32.mxu0 0.0
      %1236 = vmatmul.mubr.f32.gmra.mrb[0].mxu0 %v1155
      %v1237 = vpop.f32.mrb[0].mxu0
      %v1238 = vadd.f32 0.0, %v1237
      %v1239 = vpop.f32.mrb[0].mxu0
      %v1240 = vadd.f32 0.0, %v1239
      %1241 = vmatprep.mubr.f32.mxu0 0.0
      %1242 = vmatmul.mubr.f32.gmra.mrb[0].mxu0 %v1157
      %v1243 = vpop.f32.mrb[0].mxu0
      %v1244 = vadd.f32 0.0, %v1243
      %v1245 = vpop.f32.mrb[0].mxu0
      %v1246 = vadd.f32 0.0, %v1245
      %1247 = vdwg.mxu0
      %1248 = vrot.lane.b32.xlu0 %v468, 80
      %v1249 = vpop.permute.xlu0 %1248
      %1250 = vrot.lane.b32.xlu0 %v469, 80
      %v1251 = vpop.permute.xlu0 %1250
      %1252 = vrot.lane.b32.xlu0 %v470, 80
      %v1253 = vpop.permute.xlu0 %1252
      %1254 = vrot.lane.b32.xlu0 %v471, 80
      %v1255 = vpop.permute.xlu0 %1254
      %v1256 = vsel %vm472, %v1249, 0
      %v1258 = vsel %vm472, %v1251, 0
      %v1260 = vsel %vm472, %v1253, 0
      %v1262 = vsel %vm472, %v1255, 0
      %1264 = vmatprep.subr.mxu0 %v200
      %1265 = vmatpush1.msra.mxu0 %v199
      %1266 = vmatprep.subr.mxu0 %v202
      %1267 = vmatpush1.msra.mxu0 %v201
      %1268 = vmatprep.subr.mxu0 0.0
      %1269 = vmatpush1.msra.mxu0 0.0
      %1270 = vmatprep.subr.mxu0 0.0
      %1271 = vmatpush1.msra.mxu0 0.0
      %1272 = vmatprep.subr.mxu0 0.0
      %1273 = vmatpush1.msra.mxu0 0.0
      %1274 = vmatprep.subr.mxu0 0.0
      %1275 = vmatpush1.msra.mxu0 0.0
      %1276 = vmatprep.subr.mxu0 0.0
      %1277 = vmatpush1.msra.mxu0 0.0
      %1278 = vmatprep.subr.mxu0 0.0
      %1279 = vmatpush1.msra.mxu0 0.0
      %1280 = vmatprep.subr.mxu0 0.0
      %1281 = vmatpush1.msra.mxu0 0.0
      %1282 = vmatprep.subr.mxu0 0.0
      %1283 = vmatpush1.msra.mxu0 0.0
      %1284 = vmatprep.subr.mxu0 0.0
      %1285 = vmatpush1.msra.mxu0 0.0
      %1286 = vmatprep.subr.mxu0 0.0
      %1287 = vmatpush1.msra.mxu0 0.0
      %1288 = vmatprep.subr.mxu0 0.0
      %1289 = vmatpush1.msra.mxu0 0.0
      %1290 = vmatprep.subr.mxu0 0.0
      %1291 = vmatpush1.msra.mxu0 0.0
      %1292 = vmatprep.subr.mxu0 0.0
      %1293 = vmatpush1.msra.mxu0 0.0
      %1294 = vmatprep.subr.mxu0 0.0
      %1295 = vmatpush1.msra.mxu0 0.0
      %1296 = vmatprep.subr.mxu0 0.0
      %1297 = vmatpush1.msra.mxu0 0.0
      %1298 = vmatprep.subr.mxu0 0.0
      %1299 = vmatpush1.msra.mxu0 0.0
      %1300 = vmatprep.subr.mxu0 0.0
      %1301 = vmatpush1.msra.mxu0 0.0
      %1302 = vmatprep.subr.mxu0 0.0
      %1303 = vmatpush1.msra.mxu0 0.0
      %1304 = vmatprep.subr.mxu0 0.0
      %1305 = vmatpush1.msra.mxu0 0.0
      %1306 = vmatprep.subr.mxu0 0.0
      %1307 = vmatpush1.msra.mxu0 0.0
      %1308 = vmatprep.subr.mxu0 0.0
      %1309 = vmatpush1.msra.mxu0 0.0
      %1310 = vmatprep.subr.mxu0 0.0
      %1311 = vmatpush1.msra.mxu0 0.0
      %1312 = vmatprep.subr.mxu0 0.0
      %1313 = vmatpush1.msra.mxu0 0.0
      %1314 = vmatprep.subr.mxu0 0.0
      %1315 = vmatpush1.msra.mxu0 0.0
      %1316 = vmatprep.subr.mxu0 0.0
      %1317 = vmatpush1.msra.mxu0 0.0
      %1318 = vmatprep.subr.mxu0 0.0
      %1319 = vmatpush1.msra.mxu0 0.0
      %1320 = vmatprep.subr.mxu0 0.0
      %1321 = vmatpush1.msra.mxu0 0.0
      %1322 = vmatprep.subr.mxu0 0.0
      %1323 = vmatpush1.msra.mxu0 0.0
      %1324 = vmatprep.subr.mxu0 0.0
      %1325 = vmatpush1.msra.mxu0 0.0
      %1326 = vmatprep.subr.mxu0 0.0
      %1327 = vmatpush1.msra.mxu0 0.0
      %1328 = vmatprep.mubr.f32.mxu0 0.0
      %1329 = vmatmul.mubr.f32.gmra.mrb[0].mxu0 %v1256
      %v1330 = vpop.f32.mrb[0].mxu0
      %v1331 = vadd.f32 0.0, %v1330
      %v1332 = vpop.f32.mrb[0].mxu0
      %v1333 = vadd.f32 0.0, %v1332
      %1334 = vmatprep.mubr.f32.mxu0 0.0
      %1335 = vmatmul.mubr.f32.gmra.mrb[0].mxu0 %v1258
      %v1336 = vpop.f32.mrb[0].mxu0
      %v1337 = vadd.f32 0.0, %v1336
      %v1338 = vpop.f32.mrb[0].mxu0
      %v1339 = vadd.f32 0.0, %v1338
      %1340 = vmatprep.mubr.f32.mxu0 0.0
      %1341 = vmatmul.mubr.f32.gmra.mrb[0].mxu0 %v1260
      %v1342 = vpop.f32.mrb[0].mxu0
      %v1343 = vadd.f32 0.0, %v1342
      %v1344 = vpop.f32.mrb[0].mxu0
      %v1345 = vadd.f32 0.0, %v1344
      %1346 = vmatprep.mubr.f32.mxu0 0.0
      %1347 = vmatmul.mubr.f32.gmra.mrb[0].mxu0 %v1262
      %v1348 = vpop.f32.mrb[0].mxu0
      %v1349 = vadd.f32 0.0, %v1348
      %v1350 = vpop.f32.mrb[0].mxu0
      %v1351 = vadd.f32 0.0, %v1350
      %1352 = vdwg.mxu0
      %v1353 = vmul.f32 %v1226, %v1331
      %v1354 = vmul.f32 %v1228, %v1333
      %v1355 = vmul.f32 %v1232, %v1337
      %v1356 = vmul.f32 %v1234, %v1339
      %v1357 = vmul.f32 %v1238, %v1343
      %v1358 = vmul.f32 %v1240, %v1345
      %v1359 = vmul.f32 %v1244, %v1349
      %v1360 = vmul.f32 %v1246, %v1351
      %v1361 = vadd.f32 %v909, %v1353
      %v1362 = vadd.f32 %v910, %v1354
      %v1363 = vadd.f32 %v911, %v1355
      %v1364 = vadd.f32 %v912, %v1356
      %v1365 = vadd.f32 %v913, %v1357
      %v1366 = vadd.f32 %v914, %v1358
      %v1367 = vadd.f32 %v915, %v1359
      %v1368 = vadd.f32 %v916, %v1360
      %1369 = vrot.lane.b32.xlu0 %v448, 64
      %v1370 = vpop.permute.xlu0 %1369
      %1371 = vrot.lane.b32.xlu0 %v449, 64
      %v1372 = vpop.permute.xlu0 %1371
      %1373 = vrot.lane.b32.xlu0 %v450, 64
      %v1374 = vpop.permute.xlu0 %1373
      %1375 = vrot.lane.b32.xlu0 %v451, 64
      %v1376 = vpop.permute.xlu0 %1375
      %v1377 = vsel %vm472, %v1370, 0
      %v1379 = vsel %vm472, %v1372, 0
      %v1381 = vsel %vm472, %v1374, 0
      %v1383 = vsel %vm472, %v1376, 0
      %1385 = vmatprep.subr.mxu0 %v196
      %1386 = vmatpush1.msra.mxu0 %v195
      %1387 = vmatprep.subr.mxu0 %v198
      %1388 = vmatpush1.msra.mxu0 %v197
      %1389 = vmatprep.subr.mxu0 0.0
      %1390 = vmatpush1.msra.mxu0 0.0
      %1391 = vmatprep.subr.mxu0 0.0
      %1392 = vmatpush1.msra.mxu0 0.0
      %1393 = vmatprep.subr.mxu0 0.0
      %1394 = vmatpush1.msra.mxu0 0.0
      %1395 = vmatprep.subr.mxu0 0.0
      %1396 = vmatpush1.msra.mxu0 0.0
      %1397 = vmatprep.subr.mxu0 0.0
      %1398 = vmatpush1.msra.mxu0 0.0
      %1399 = vmatprep.subr.mxu0 0.0
      %1400 = vmatpush1.msra.mxu0 0.0
      %1401 = vmatprep.subr.mxu0 0.0
      %1402 = vmatpush1.msra.mxu0 0.0
      %1403 = vmatprep.subr.mxu0 0.0
      %1404 = vmatpush1.msra.mxu0 0.0
      %1405 = vmatprep.subr.mxu0 0.0
      %1406 = vmatpush1.msra.mxu0 0.0
      %1407 = vmatprep.subr.mxu0 0.0
      %1408 = vmatpush1.msra.mxu0 0.0
      %1409 = vmatprep.subr.mxu0 0.0
      %1410 = vmatpush1.msra.mxu0 0.0
      %1411 = vmatprep.subr.mxu0 0.0
      %1412 = vmatpush1.msra.mxu0 0.0
      %1413 = vmatprep.subr.mxu0 0.0
      %1414 = vmatpush1.msra.mxu0 0.0
      %1415 = vmatprep.subr.mxu0 0.0
      %1416 = vmatpush1.msra.mxu0 0.0
      %1417 = vmatprep.subr.mxu0 0.0
      %1418 = vmatpush1.msra.mxu0 0.0
      %1419 = vmatprep.subr.mxu0 0.0
      %1420 = vmatpush1.msra.mxu0 0.0
      %1421 = vmatprep.subr.mxu0 0.0
      %1422 = vmatpush1.msra.mxu0 0.0
      %1423 = vmatprep.subr.mxu0 0.0
      %1424 = vmatpush1.msra.mxu0 0.0
      %1425 = vmatprep.subr.mxu0 0.0
      %1426 = vmatpush1.msra.mxu0 0.0
      %1427 = vmatprep.subr.mxu0 0.0
      %1428 = vmatpush1.msra.mxu0 0.0
      %1429 = vmatprep.subr.mxu0 0.0
      %1430 = vmatpush1.msra.mxu0 0.0
      %1431 = vmatprep.subr.mxu0 0.0
      %1432 = vmatpush1.msra.mxu0 0.0
      %1433 = vmatprep.subr.mxu0 0.0
      %1434 = vmatpush1.msra.mxu0 0.0
      %1435 = vmatprep.subr.mxu0 0.0
      %1436 = vmatpush1.msra.mxu0 0.0
      %1437 = vmatprep.subr.mxu0 0.0
      %1438 = vmatpush1.msra.mxu0 0.0
      %1439 = vmatprep.subr.mxu0 0.0
      %1440 = vmatpush1.msra.mxu0 0.0
      %1441 = vmatprep.subr.mxu0 0.0
      %1442 = vmatpush1.msra.mxu0 0.0
      %1443 = vmatprep.subr.mxu0 0.0
      %1444 = vmatpush1.msra.mxu0 0.0
      %1445 = vmatprep.subr.mxu0 0.0
      %1446 = vmatpush1.msra.mxu0 0.0
      %1447 = vmatprep.subr.mxu0 0.0
      %1448 = vmatpush1.msra.mxu0 0.0
      %1449 = vmatprep.mubr.f32.mxu0 0.0
      %1450 = vmatmul.mubr.f32.gmra.mrb[0].mxu0 %v1377
      %v1451 = vpop.f32.mrb[0].mxu0
      %v1452 = vadd.f32 0.0, %v1451
      %v1453 = vpop.f32.mrb[0].mxu0
      %v1454 = vadd.f32 0.0, %v1453
      %1455 = vmatprep.mubr.f32.mxu0 0.0
      %1456 = vmatmul.mubr.f32.gmra.mrb[0].mxu0 %v1379
      %v1457 = vpop.f32.mrb[0].mxu0
      %v1458 = vadd.f32 0.0, %v1457
      %v1459 = vpop.f32.mrb[0].mxu0
      %v1460 = vadd.f32 0.0, %v1459
      %1461 = vmatprep.mubr.f32.mxu0 0.0
      %1462 = vmatmul.mubr.f32.gmra.mrb[0].mxu0 %v1381
      %v1463 = vpop.f32.mrb[0].mxu0
      %v1464 = vadd.f32 0.0, %v1463
      %v1465 = vpop.f32.mrb[0].mxu0
      %v1466 = vadd.f32 0.0, %v1465
      %1467 = vmatprep.mubr.f32.mxu0 0.0
      %1468 = vmatmul.mubr.f32.gmra.mrb[0].mxu0 %v1383
      %v1469 = vpop.f32.mrb[0].mxu0
      %v1470 = vadd.f32 0.0, %v1469
      %v1471 = vpop.f32.mrb[0].mxu0
      %v1472 = vadd.f32 0.0, %v1471
      %1473 = vdwg.mxu0
      %1474 = vrot.lane.b32.xlu0 %v468, 64
      %v1475 = vpop.permute.xlu0 %1474
      %1476 = vrot.lane.b32.xlu0 %v469, 64
      %v1477 = vpop.permute.xlu0 %1476
      %1478 = vrot.lane.b32.xlu0 %v470, 64
      %v1479 = vpop.permute.xlu0 %1478
      %1480 = vrot.lane.b32.xlu0 %v471, 64
      %v1481 = vpop.permute.xlu0 %1480
      %v1482 = vsel %vm472, %v1475, 0
      %v1484 = vsel %vm472, %v1477, 0
      %v1486 = vsel %vm472, %v1479, 0
      %v1488 = vsel %vm472, %v1481, 0
      %1490 = vmatprep.subr.mxu0 %v200
      %1491 = vmatpush1.msra.mxu0 %v199
      %1492 = vmatprep.subr.mxu0 %v202
      %1493 = vmatpush1.msra.mxu0 %v201
      %1494 = vmatprep.subr.mxu0 0.0
      %1495 = vmatpush1.msra.mxu0 0.0
      %1496 = vmatprep.subr.mxu0 0.0
      %1497 = vmatpush1.msra.mxu0 0.0
      %1498 = vmatprep.subr.mxu0 0.0
      %1499 = vmatpush1.msra.mxu0 0.0
      %1500 = vmatprep.subr.mxu0 0.0
      %1501 = vmatpush1.msra.mxu0 0.0
      %1502 = vmatprep.subr.mxu0 0.0
      %1503 = vmatpush1.msra.mxu0 0.0
      %1504 = vmatprep.subr.mxu0 0.0
      %1505 = vmatpush1.msra.mxu0 0.0
      %1506 = vmatprep.subr.mxu0 0.0
      %1507 = vmatpush1.msra.mxu0 0.0
      %1508 = vmatprep.subr.mxu0 0.0
      %1509 = vmatpush1.msra.mxu0 0.0
      %1510 = vmatprep.subr.mxu0 0.0
      %1511 = vmatpush1.msra.mxu0 0.0
      %1512 = vmatprep.subr.mxu0 0.0
      %1513 = vmatpush1.msra.mxu0 0.0
      %1514 = vmatprep.subr.mxu0 0.0
      %1515 = vmatpush1.msra.mxu0 0.0
      %1516 = vmatprep.subr.mxu0 0.0
      %1517 = vmatpush1.msra.mxu0 0.0
      %1518 = vmatprep.subr.mxu0 0.0
      %1519 = vmatpush1.msra.mxu0 0.0
      %1520 = vmatprep.subr.mxu0 0.0
      %1521 = vmatpush1.msra.mxu0 0.0
      %1522 = vmatprep.subr.mxu0 0.0
      %1523 = vmatpush1.msra.mxu0 0.0
      %1524 = vmatprep.subr.mxu0 0.0
      %1525 = vmatpush1.msra.mxu0 0.0
      %1526 = vmatprep.subr.mxu0 0.0
      %1527 = vmatpush1.msra.mxu0 0.0
      %1528 = vmatprep.subr.mxu0 0.0
      %1529 = vmatpush1.msra.mxu0 0.0
      %1530 = vmatprep.subr.mxu0 0.0
      %1531 = vmatpush1.msra.mxu0 0.0
      %1532 = vmatprep.subr.mxu0 0.0
      %1533 = vmatpush1.msra.mxu0 0.0
      %1534 = vmatprep.subr.mxu0 0.0
      %1535 = vmatpush1.msra.mxu0 0.0
      %1536 = vmatprep.subr.mxu0 0.0
      %1537 = vmatpush1.msra.mxu0 0.0
      %1538 = vmatprep.subr.mxu0 0.0
      %1539 = vmatpush1.msra.mxu0 0.0
      %1540 = vmatprep.subr.mxu0 0.0
      %1541 = vmatpush1.msra.mxu0 0.0
      %1542 = vmatprep.subr.mxu0 0.0
      %1543 = vmatpush1.msra.mxu0 0.0
      %1544 = vmatprep.subr.mxu0 0.0
      %1545 = vmatpush1.msra.mxu0 0.0
      %1546 = vmatprep.subr.mxu0 0.0
      %1547 = vmatpush1.msra.mxu0 0.0
      %1548 = vmatprep.subr.mxu0 0.0
      %1549 = vmatpush1.msra.mxu0 0.0
      %1550 = vmatprep.subr.mxu0 0.0
      %1551 = vmatpush1.msra.mxu0 0.0
      %1552 = vmatprep.subr.mxu0 0.0
      %1553 = vmatpush1.msra.mxu0 0.0
      %1554 = vmatprep.mubr.f32.mxu0 0.0
      %1555 = vmatmul.mubr.f32.gmra.mrb[0].mxu0 %v1482
      %v1556 = vpop.f32.mrb[0].mxu0
      %v1557 = vadd.f32 0.0, %v1556
      %v1558 = vpop.f32.mrb[0].mxu0
      %v1559 = vadd.f32 0.0, %v1558
      %1560 = vmatprep.mubr.f32.mxu0 0.0
      %1561 = vmatmul.mubr.f32.gmra.mrb[0].mxu0 %v1484
      %v1562 = vpop.f32.mrb[0].mxu0
      %v1563 = vadd.f32 0.0, %v1562
      %v1564 = vpop.f32.mrb[0].mxu0
      %v1565 = vadd.f32 0.0, %v1564
      %1566 = vmatprep.mubr.f32.mxu0 0.0
      %1567 = vmatmul.mubr.f32.gmra.mrb[0].mxu0 %v1486
      %v1568 = vpop.f32.mrb[0].mxu0
      %v1569 = vadd.f32 0.0, %v1568
      %v1570 = vpop.f32.mrb[0].mxu0
      %v1571 = vadd.f32 0.0, %v1570
      %1572 = vmatprep.mubr.f32.mxu0 0.0
      %1573 = vmatmul.mubr.f32.gmra.mrb[0].mxu0 %v1488
      %v1574 = vpop.f32.mrb[0].mxu0
      %v1575 = vadd.f32 0.0, %v1574
      %v1576 = vpop.f32.mrb[0].mxu0
      %v1577 = vadd.f32 0.0, %v1576
      %1578 = vdwg.mxu0
      %v1579 = vmul.f32 %v1452, %v1557
      %v1580 = vmul.f32 %v1454, %v1559
      %v1581 = vmul.f32 %v1458, %v1563
      %v1582 = vmul.f32 %v1460, %v1565
      %v1583 = vmul.f32 %v1464, %v1569
      %v1584 = vmul.f32 %v1466, %v1571
      %v1585 = vmul.f32 %v1470, %v1575
      %v1586 = vmul.f32 %v1472, %v1577
      %v1587 = vadd.f32 %v1135, %v1579
      %v1588 = vadd.f32 %v1136, %v1580
      %v1589 = vadd.f32 %v1137, %v1581
      %v1590 = vadd.f32 %v1138, %v1582
      %v1591 = vadd.f32 %v1139, %v1583
      %v1592 = vadd.f32 %v1140, %v1584
      %v1593 = vadd.f32 %v1141, %v1585
      %v1594 = vadd.f32 %v1142, %v1586
      %1595 = vrot.lane.b32.xlu0 %v448, 48
      %v1596 = vpop.permute.xlu0 %1595
      %1597 = vrot.lane.b32.xlu0 %v449, 48
      %v1598 = vpop.permute.xlu0 %1597
      %1599 = vrot.lane.b32.xlu0 %v450, 48
      %v1600 = vpop.permute.xlu0 %1599
      %1601 = vrot.lane.b32.xlu0 %v451, 48
      %v1602 = vpop.permute.xlu0 %1601
      %v1603 = vsel %vm472, %v1596, 0
      %v1605 = vsel %vm472, %v1598, 0
      %v1607 = vsel %vm472, %v1600, 0
      %v1609 = vsel %vm472, %v1602, 0
      %1611 = vmatprep.subr.mxu0 %v196
      %1612 = vmatpush1.msra.mxu0 %v195
      %1613 = vmatprep.subr.mxu0 %v198
      %1614 = vmatpush1.msra.mxu0 %v197
      %1615 = vmatprep.subr.mxu0 0.0
      %1616 = vmatpush1.msra.mxu0 0.0
      %1617 = vmatprep.subr.mxu0 0.0
      %1618 = vmatpush1.msra.mxu0 0.0
      %1619 = vmatprep.subr.mxu0 0.0
      %1620 = vmatpush1.msra.mxu0 0.0
      %1621 = vmatprep.subr.mxu0 0.0
      %1622 = vmatpush1.msra.mxu0 0.0
      %1623 = vmatprep.subr.mxu0 0.0
      %1624 = vmatpush1.msra.mxu0 0.0
      %1625 = vmatprep.subr.mxu0 0.0
      %1626 = vmatpush1.msra.mxu0 0.0
      %1627 = vmatprep.subr.mxu0 0.0
      %1628 = vmatpush1.msra.mxu0 0.0
      %1629 = vmatprep.subr.mxu0 0.0
      %1630 = vmatpush1.msra.mxu0 0.0
      %1631 = vmatprep.subr.mxu0 0.0
      %1632 = vmatpush1.msra.mxu0 0.0
      %1633 = vmatprep.subr.mxu0 0.0
      %1634 = vmatpush1.msra.mxu0 0.0
      %1635 = vmatprep.subr.mxu0 0.0
      %1636 = vmatpush1.msra.mxu0 0.0
      %1637 = vmatprep.subr.mxu0 0.0
      %1638 = vmatpush1.msra.mxu0 0.0
      %1639 = vmatprep.subr.mxu0 0.0
      %1640 = vmatpush1.msra.mxu0 0.0
      %1641 = vmatprep.subr.mxu0 0.0
      %1642 = vmatpush1.msra.mxu0 0.0
      %1643 = vmatprep.subr.mxu0 0.0
      %1644 = vmatpush1.msra.mxu0 0.0
      %1645 = vmatprep.subr.mxu0 0.0
      %1646 = vmatpush1.msra.mxu0 0.0
      %1647 = vmatprep.subr.mxu0 0.0
      %1648 = vmatpush1.msra.mxu0 0.0
      %1649 = vmatprep.subr.mxu0 0.0
      %1650 = vmatpush1.msra.mxu0 0.0
      %1651 = vmatprep.subr.mxu0 0.0
      %1652 = vmatpush1.msra.mxu0 0.0
      %1653 = vmatprep.subr.mxu0 0.0
      %1654 = vmatpush1.msra.mxu0 0.0
      %1655 = vmatprep.subr.mxu0 0.0
      %1656 = vmatpush1.msra.mxu0 0.0
      %1657 = vmatprep.subr.mxu0 0.0
      %1658 = vmatpush1.msra.mxu0 0.0
      %1659 = vmatprep.subr.mxu0 0.0
      %1660 = vmatpush1.msra.mxu0 0.0
      %1661 = vmatprep.subr.mxu0 0.0
      %1662 = vmatpush1.msra.mxu0 0.0
      %1663 = vmatprep.subr.mxu0 0.0
      %1664 = vmatpush1.msra.mxu0 0.0
      %1665 = vmatprep.subr.mxu0 0.0
      %1666 = vmatpush1.msra.mxu0 0.0
      %1667 = vmatprep.subr.mxu0 0.0
      %1668 = vmatpush1.msra.mxu0 0.0
      %1669 = vmatprep.subr.mxu0 0.0
      %1670 = vmatpush1.msra.mxu0 0.0
      %1671 = vmatprep.subr.mxu0 0.0
      %1672 = vmatpush1.msra.mxu0 0.0
      %1673 = vmatprep.subr.mxu0 0.0
      %1674 = vmatpush1.msra.mxu0 0.0
      %1675 = vmatprep.mubr.f32.mxu0 0.0
      %1676 = vmatmul.mubr.f32.gmra.mrb[0].mxu0 %v1603
      %v1677 = vpop.f32.mrb[0].mxu0
      %v1678 = vadd.f32 0.0, %v1677
      %v1679 = vpop.f32.mrb[0].mxu0
      %v1680 = vadd.f32 0.0, %v1679
      %1681 = vmatprep.mubr.f32.mxu0 0.0
      %1682 = vmatmul.mubr.f32.gmra.mrb[0].mxu0 %v1605
      %v1683 = vpop.f32.mrb[0].mxu0
      %v1684 = vadd.f32 0.0, %v1683
      %v1685 = vpop.f32.mrb[0].mxu0
      %v1686 = vadd.f32 0.0, %v1685
      %1687 = vmatprep.mubr.f32.mxu0 0.0
      %1688 = vmatmul.mubr.f32.gmra.mrb[0].mxu0 %v1607
      %v1689 = vpop.f32.mrb[0].mxu0
      %v1690 = vadd.f32 0.0, %v1689
      %v1691 = vpop.f32.mrb[0].mxu0
      %v1692 = vadd.f32 0.0, %v1691
      %1693 = vmatprep.mubr.f32.mxu0 0.0
      %1694 = vmatmul.mubr.f32.gmra.mrb[0].mxu0 %v1609
      %v1695 = vpop.f32.mrb[0].mxu0
      %v1696 = vadd.f32 0.0, %v1695
      %v1697 = vpop.f32.mrb[0].mxu0
      %v1698 = vadd.f32 0.0, %v1697
      %1699 = vdwg.mxu0
      %1700 = vrot.lane.b32.xlu0 %v468, 48
      %v1701 = vpop.permute.xlu0 %1700
      %1702 = vrot.lane.b32.xlu0 %v469, 48
      %v1703 = vpop.permute.xlu0 %1702
      %1704 = vrot.lane.b32.xlu0 %v470, 48
      %v1705 = vpop.permute.xlu0 %1704
      %1706 = vrot.lane.b32.xlu0 %v471, 48
      %v1707 = vpop.permute.xlu0 %1706
      %v1708 = vsel %vm472, %v1701, 0
      %v1710 = vsel %vm472, %v1703, 0
      %v1712 = vsel %vm472, %v1705, 0
      %v1714 = vsel %vm472, %v1707, 0
      %1716 = vmatprep.subr.mxu0 %v200
      %1717 = vmatpush1.msra.mxu0 %v199
      %1718 = vmatprep.subr.mxu0 %v202
      %1719 = vmatpush1.msra.mxu0 %v201
      %1720 = vmatprep.subr.mxu0 0.0
      %1721 = vmatpush1.msra.mxu0 0.0
      %1722 = vmatprep.subr.mxu0 0.0
      %1723 = vmatpush1.msra.mxu0 0.0
      %1724 = vmatprep.subr.mxu0 0.0
      %1725 = vmatpush1.msra.mxu0 0.0
      %1726 = vmatprep.subr.mxu0 0.0
      %1727 = vmatpush1.msra.mxu0 0.0
      %1728 = vmatprep.subr.mxu0 0.0
      %1729 = vmatpush1.msra.mxu0 0.0
      %1730 = vmatprep.subr.mxu0 0.0
      %1731 = vmatpush1.msra.mxu0 0.0
      %1732 = vmatprep.subr.mxu0 0.0
      %1733 = vmatpush1.msra.mxu0 0.0
      %1734 = vmatprep.subr.mxu0 0.0
      %1735 = vmatpush1.msra.mxu0 0.0
      %1736 = vmatprep.subr.mxu0 0.0
      %1737 = vmatpush1.msra.mxu0 0.0
      %1738 = vmatprep.subr.mxu0 0.0
      %1739 = vmatpush1.msra.mxu0 0.0
      %1740 = vmatprep.subr.mxu0 0.0
      %1741 = vmatpush1.msra.mxu0 0.0
      %1742 = vmatprep.subr.mxu0 0.0
      %1743 = vmatpush1.msra.mxu0 0.0
      %1744 = vmatprep.subr.mxu0 0.0
      %1745 = vmatpush1.msra.mxu0 0.0
      %1746 = vmatprep.subr.mxu0 0.0
      %1747 = vmatpush1.msra.mxu0 0.0
      %1748 = vmatprep.subr.mxu0 0.0
      %1749 = vmatpush1.msra.mxu0 0.0
      %1750 = vmatprep.subr.mxu0 0.0
      %1751 = vmatpush1.msra.mxu0 0.0
      %1752 = vmatprep.subr.mxu0 0.0
      %1753 = vmatpush1.msra.mxu0 0.0
      %1754 = vmatprep.subr.mxu0 0.0
      %1755 = vmatpush1.msra.mxu0 0.0
      %1756 = vmatprep.subr.mxu0 0.0
      %1757 = vmatpush1.msra.mxu0 0.0
      %1758 = vmatprep.subr.mxu0 0.0
      %1759 = vmatpush1.msra.mxu0 0.0
      %1760 = vmatprep.subr.mxu0 0.0
      %1761 = vmatpush1.msra.mxu0 0.0
      %1762 = vmatprep.subr.mxu0 0.0
      %1763 = vmatpush1.msra.mxu0 0.0
      %1764 = vmatprep.subr.mxu0 0.0
      %1765 = vmatpush1.msra.mxu0 0.0
      %1766 = vmatprep.subr.mxu0 0.0
      %1767 = vmatpush1.msra.mxu0 0.0
      %1768 = vmatprep.subr.mxu0 0.0
      %1769 = vmatpush1.msra.mxu0 0.0
      %1770 = vmatprep.subr.mxu0 0.0
      %1771 = vmatpush1.msra.mxu0 0.0
      %1772 = vmatprep.subr.mxu0 0.0
      %1773 = vmatpush1.msra.mxu0 0.0
      %1774 = vmatprep.subr.mxu0 0.0
      %1775 = vmatpush1.msra.mxu0 0.0
      %1776 = vmatprep.subr.mxu0 0.0
      %1777 = vmatpush1.msra.mxu0 0.0
      %1778 = vmatprep.subr.mxu0 0.0
      %1779 = vmatpush1.msra.mxu0 0.0
      %1780 = vmatprep.mubr.f32.mxu0 0.0
      %1781 = vmatmul.mubr.f32.gmra.mrb[0].mxu0 %v1708
      %v1782 = vpop.f32.mrb[0].mxu0
      %v1783 = vadd.f32 0.0, %v1782
      %v1784 = vpop.f32.mrb[0].mxu0
      %v1785 = vadd.f32 0.0, %v1784
      %1786 = vmatprep.mubr.f32.mxu0 0.0
      %1787 = vmatmul.mubr.f32.gmra.mrb[0].mxu0 %v1710
      %v1788 = vpop.f32.mrb[0].mxu0
      %v1789 = vadd.f32 0.0, %v1788
      %v1790 = vpop.f32.mrb[0].mxu0
      %v1791 = vadd.f32 0.0, %v1790
      %1792 = vmatprep.mubr.f32.mxu0 0.0
      %1793 = vmatmul.mubr.f32.gmra.mrb[0].mxu0 %v1712
      %v1794 = vpop.f32.mrb[0].mxu0
      %v1795 = vadd.f32 0.0, %v1794
      %v1796 = vpop.f32.mrb[0].mxu0
      %v1797 = vadd.f32 0.0, %v1796
      %1798 = vmatprep.mubr.f32.mxu0 0.0
      %1799 = vmatmul.mubr.f32.gmra.mrb[0].mxu0 %v1714
      %v1800 = vpop.f32.mrb[0].mxu0
      %v1801 = vadd.f32 0.0, %v1800
      %v1802 = vpop.f32.mrb[0].mxu0
      %v1803 = vadd.f32 0.0, %v1802
      %1804 = vdwg.mxu0
      %v1805 = vmul.f32 %v1678, %v1783
      %v1806 = vmul.f32 %v1680, %v1785
      %v1807 = vmul.f32 %v1684, %v1789
      %v1808 = vmul.f32 %v1686, %v1791
      %v1809 = vmul.f32 %v1690, %v1795
      %v1810 = vmul.f32 %v1692, %v1797
      %v1811 = vmul.f32 %v1696, %v1801
      %v1812 = vmul.f32 %v1698, %v1803
      %v1813 = vadd.f32 %v1361, %v1805
      %v1814 = vadd.f32 %v1362, %v1806
      %v1815 = vadd.f32 %v1363, %v1807
      %v1816 = vadd.f32 %v1364, %v1808
      %v1817 = vadd.f32 %v1365, %v1809
      %v1818 = vadd.f32 %v1366, %v1810
      %v1819 = vadd.f32 %v1367, %v1811
      %v1820 = vadd.f32 %v1368, %v1812
      %1821 = vrot.lane.b32.xlu0 %v448, 32
      %v1822 = vpop.permute.xlu0 %1821
      %1823 = vrot.lane.b32.xlu0 %v449, 32
      %v1824 = vpop.permute.xlu0 %1823
      %1825 = vrot.lane.b32.xlu0 %v450, 32
      %v1826 = vpop.permute.xlu0 %1825
      %1827 = vrot.lane.b32.xlu0 %v451, 32
      %v1828 = vpop.permute.xlu0 %1827
      %v1829 = vsel %vm472, %v1822, 0
      %v1831 = vsel %vm472, %v1824, 0
      %v1833 = vsel %vm472, %v1826, 0
      %v1835 = vsel %vm472, %v1828, 0
      %1837 = vmatprep.subr.mxu0 %v196
      %1838 = vmatpush1.msra.mxu0 %v195
      %1839 = vmatprep.subr.mxu0 %v198
      %1840 = vmatpush1.msra.mxu0 %v197
      %1841 = vmatprep.subr.mxu0 0.0
      %1842 = vmatpush1.msra.mxu0 0.0
      %1843 = vmatprep.subr.mxu0 0.0
      %1844 = vmatpush1.msra.mxu0 0.0
      %1845 = vmatprep.subr.mxu0 0.0
      %1846 = vmatpush1.msra.mxu0 0.0
      %1847 = vmatprep.subr.mxu0 0.0
      %1848 = vmatpush1.msra.mxu0 0.0
      %1849 = vmatprep.subr.mxu0 0.0
      %1850 = vmatpush1.msra.mxu0 0.0
      %1851 = vmatprep.subr.mxu0 0.0
      %1852 = vmatpush1.msra.mxu0 0.0
      %1853 = vmatprep.subr.mxu0 0.0
      %1854 = vmatpush1.msra.mxu0 0.0
      %1855 = vmatprep.subr.mxu0 0.0
      %1856 = vmatpush1.msra.mxu0 0.0
      %1857 = vmatprep.subr.mxu0 0.0
      %1858 = vmatpush1.msra.mxu0 0.0
      %1859 = vmatprep.subr.mxu0 0.0
      %1860 = vmatpush1.msra.mxu0 0.0
      %1861 = vmatprep.subr.mxu0 0.0
      %1862 = vmatpush1.msra.mxu0 0.0
      %1863 = vmatprep.subr.mxu0 0.0
      %1864 = vmatpush1.msra.mxu0 0.0
      %1865 = vmatprep.subr.mxu0 0.0
      %1866 = vmatpush1.msra.mxu0 0.0
      %1867 = vmatprep.subr.mxu0 0.0
      %1868 = vmatpush1.msra.mxu0 0.0
      %1869 = vmatprep.subr.mxu0 0.0
      %1870 = vmatpush1.msra.mxu0 0.0
      %1871 = vmatprep.subr.mxu0 0.0
      %1872 = vmatpush1.msra.mxu0 0.0
      %1873 = vmatprep.subr.mxu0 0.0
      %1874 = vmatpush1.msra.mxu0 0.0
      %1875 = vmatprep.subr.mxu0 0.0
      %1876 = vmatpush1.msra.mxu0 0.0
      %1877 = vmatprep.subr.mxu0 0.0
      %1878 = vmatpush1.msra.mxu0 0.0
      %1879 = vmatprep.subr.mxu0 0.0
      %1880 = vmatpush1.msra.mxu0 0.0
      %1881 = vmatprep.subr.mxu0 0.0
      %1882 = vmatpush1.msra.mxu0 0.0
      %1883 = vmatprep.subr.mxu0 0.0
      %1884 = vmatpush1.msra.mxu0 0.0
      %1885 = vmatprep.subr.mxu0 0.0
      %1886 = vmatpush1.msra.mxu0 0.0
      %1887 = vmatprep.subr.mxu0 0.0
      %1888 = vmatpush1.msra.mxu0 0.0
      %1889 = vmatprep.subr.mxu0 0.0
      %1890 = vmatpush1.msra.mxu0 0.0
      %1891 = vmatprep.subr.mxu0 0.0
      %1892 = vmatpush1.msra.mxu0 0.0
      %1893 = vmatprep.subr.mxu0 0.0
      %1894 = vmatpush1.msra.mxu0 0.0
      %1895 = vmatprep.subr.mxu0 0.0
      %1896 = vmatpush1.msra.mxu0 0.0
      %1897 = vmatprep.subr.mxu0 0.0
      %1898 = vmatpush1.msra.mxu0 0.0
      %1899 = vmatprep.subr.mxu0 0.0
      %1900 = vmatpush1.msra.mxu0 0.0
      %1901 = vmatprep.mubr.f32.mxu0 0.0
      %1902 = vmatmul.mubr.f32.gmra.mrb[0].mxu0 %v1829
      %v1903 = vpop.f32.mrb[0].mxu0
      %v1904 = vadd.f32 0.0, %v1903
      %v1905 = vpop.f32.mrb[0].mxu0
      %v1906 = vadd.f32 0.0, %v1905
      %1907 = vmatprep.mubr.f32.mxu0 0.0
      %1908 = vmatmul.mubr.f32.gmra.mrb[0].mxu0 %v1831
      %v1909 = vpop.f32.mrb[0].mxu0
      %v1910 = vadd.f32 0.0, %v1909
      %v1911 = vpop.f32.mrb[0].mxu0
      %v1912 = vadd.f32 0.0, %v1911
      %1913 = vmatprep.mubr.f32.mxu0 0.0
      %1914 = vmatmul.mubr.f32.gmra.mrb[0].mxu0 %v1833
      %v1915 = vpop.f32.mrb[0].mxu0
      %v1916 = vadd.f32 0.0, %v1915
      %v1917 = vpop.f32.mrb[0].mxu0
      %v1918 = vadd.f32 0.0, %v1917
      %1919 = vmatprep.mubr.f32.mxu0 0.0
      %1920 = vmatmul.mubr.f32.gmra.mrb[0].mxu0 %v1835
      %v1921 = vpop.f32.mrb[0].mxu0
      %v1922 = vadd.f32 0.0, %v1921
      %v1923 = vpop.f32.mrb[0].mxu0
      %v1924 = vadd.f32 0.0, %v1923
      %1925 = vdwg.mxu0
      %1926 = vrot.lane.b32.xlu0 %v468, 32
      %v1927 = vpop.permute.xlu0 %1926
      %1928 = vrot.lane.b32.xlu0 %v469, 32
      %v1929 = vpop.permute.xlu0 %1928
      %1930 = vrot.lane.b32.xlu0 %v470, 32
      %v1931 = vpop.permute.xlu0 %1930
      %1932 = vrot.lane.b32.xlu0 %v471, 32
      %v1933 = vpop.permute.xlu0 %1932
      %v1934 = vsel %vm472, %v1927, 0
      %v1936 = vsel %vm472, %v1929, 0
      %v1938 = vsel %vm472, %v1931, 0
      %v1940 = vsel %vm472, %v1933, 0
      %1942 = vmatprep.subr.mxu0 %v200
      %1943 = vmatpush1.msra.mxu0 %v199
      %1944 = vmatprep.subr.mxu0 %v202
      %1945 = vmatpush1.msra.mxu0 %v201
      %1946 = vmatprep.subr.mxu0 0.0
      %1947 = vmatpush1.msra.mxu0 0.0
      %1948 = vmatprep.subr.mxu0 0.0
      %1949 = vmatpush1.msra.mxu0 0.0
      %1950 = vmatprep.subr.mxu0 0.0
      %1951 = vmatpush1.msra.mxu0 0.0
      %1952 = vmatprep.subr.mxu0 0.0
      %1953 = vmatpush1.msra.mxu0 0.0
      %1954 = vmatprep.subr.mxu0 0.0
      %1955 = vmatpush1.msra.mxu0 0.0
      %1956 = vmatprep.subr.mxu0 0.0
      %1957 = vmatpush1.msra.mxu0 0.0
      %1958 = vmatprep.subr.mxu0 0.0
      %1959 = vmatpush1.msra.mxu0 0.0
      %1960 = vmatprep.subr.mxu0 0.0
      %1961 = vmatpush1.msra.mxu0 0.0
      %1962 = vmatprep.subr.mxu0 0.0
      %1963 = vmatpush1.msra.mxu0 0.0
      %1964 = vmatprep.subr.mxu0 0.0
      %1965 = vmatpush1.msra.mxu0 0.0
      %1966 = vmatprep.subr.mxu0 0.0
      %1967 = vmatpush1.msra.mxu0 0.0
      %1968 = vmatprep.subr.mxu0 0.0
      %1969 = vmatpush1.msra.mxu0 0.0
      %1970 = vmatprep.subr.mxu0 0.0
      %1971 = vmatpush1.msra.mxu0 0.0
      %1972 = vmatprep.subr.mxu0 0.0
      %1973 = vmatpush1.msra.mxu0 0.0
      %1974 = vmatprep.subr.mxu0 0.0
      %1975 = vmatpush1.msra.mxu0 0.0
      %1976 = vmatprep.subr.mxu0 0.0
      %1977 = vmatpush1.msra.mxu0 0.0
      %1978 = vmatprep.subr.mxu0 0.0
      %1979 = vmatpush1.msra.mxu0 0.0
      %1980 = vmatprep.subr.mxu0 0.0
      %1981 = vmatpush1.msra.mxu0 0.0
      %1982 = vmatprep.subr.mxu0 0.0
      %1983 = vmatpush1.msra.mxu0 0.0
      %1984 = vmatprep.subr.mxu0 0.0
      %1985 = vmatpush1.msra.mxu0 0.0
      %1986 = vmatprep.subr.mxu0 0.0
      %1987 = vmatpush1.msra.mxu0 0.0
      %1988 = vmatprep.subr.mxu0 0.0
      %1989 = vmatpush1.msra.mxu0 0.0
      %1990 = vmatprep.subr.mxu0 0.0
      %1991 = vmatpush1.msra.mxu0 0.0
      %1992 = vmatprep.subr.mxu0 0.0
      %1993 = vmatpush1.msra.mxu0 0.0
      %1994 = vmatprep.subr.mxu0 0.0
      %1995 = vmatpush1.msra.mxu0 0.0
      %1996 = vmatprep.subr.mxu0 0.0
      %1997 = vmatpush1.msra.mxu0 0.0
      %1998 = vmatprep.subr.mxu0 0.0
      %1999 = vmatpush1.msra.mxu0 0.0
      %2000 = vmatprep.subr.mxu0 0.0
      %2001 = vmatpush1.msra.mxu0 0.0
      %2002 = vmatprep.subr.mxu0 0.0
      %2003 = vmatpush1.msra.mxu0 0.0
      %2004 = vmatprep.subr.mxu0 0.0
      %2005 = vmatpush1.msra.mxu0 0.0
      %2006 = vmatprep.mubr.f32.mxu0 0.0
      %2007 = vmatmul.mubr.f32.gmra.mrb[0].mxu0 %v1934
      %v2008 = vpop.f32.mrb[0].mxu0
      %v2009 = vadd.f32 0.0, %v2008
      %v2010 = vpop.f32.mrb[0].mxu0
      %v2011 = vadd.f32 0.0, %v2010
      %2012 = vmatprep.mubr.f32.mxu0 0.0
      %2013 = vmatmul.mubr.f32.gmra.mrb[0].mxu0 %v1936
      %v2014 = vpop.f32.mrb[0].mxu0
      %v2015 = vadd.f32 0.0, %v2014
      %v2016 = vpop.f32.mrb[0].mxu0
      %v2017 = vadd.f32 0.0, %v2016
      %2018 = vmatprep.mubr.f32.mxu0 0.0
      %2019 = vmatmul.mubr.f32.gmra.mrb[0].mxu0 %v1938
      %v2020 = vpop.f32.mrb[0].mxu0
      %v2021 = vadd.f32 0.0, %v2020
      %v2022 = vpop.f32.mrb[0].mxu0
      %v2023 = vadd.f32 0.0, %v2022
      %2024 = vmatprep.mubr.f32.mxu0 0.0
      %2025 = vmatmul.mubr.f32.gmra.mrb[0].mxu0 %v1940
      %v2026 = vpop.f32.mrb[0].mxu0
      %v2027 = vadd.f32 0.0, %v2026
      %v2028 = vpop.f32.mrb[0].mxu0
      %v2029 = vadd.f32 0.0, %v2028
      %2030 = vdwg.mxu0
      %v2031 = vmul.f32 %v1904, %v2009
      %v2032 = vmul.f32 %v1906, %v2011
      %v2033 = vmul.f32 %v1910, %v2015
      %v2034 = vmul.f32 %v1912, %v2017
      %v2035 = vmul.f32 %v1916, %v2021
      %v2036 = vmul.f32 %v1918, %v2023
      %v2037 = vmul.f32 %v1922, %v2027
      %v2038 = vmul.f32 %v1924, %v2029
      %v2039 = vadd.f32 %v1587, %v2031
      %v2040 = vadd.f32 %v1588, %v2032
      %v2041 = vadd.f32 %v1589, %v2033
      %v2042 = vadd.f32 %v1590, %v2034
      %v2043 = vadd.f32 %v1591, %v2035
      %v2044 = vadd.f32 %v1592, %v2036
      %v2045 = vadd.f32 %v1593, %v2037
      %v2046 = vadd.f32 %v1594, %v2038
      %2047 = vrot.lane.b32.xlu0 %v448, 16
      %v2048 = vpop.permute.xlu0 %2047
      %2049 = vrot.lane.b32.xlu0 %v449, 16
      %v2050 = vpop.permute.xlu0 %2049
      %2051 = vrot.lane.b32.xlu0 %v450, 16
      %v2052 = vpop.permute.xlu0 %2051
      %2053 = vrot.lane.b32.xlu0 %v451, 16
      %v2054 = vpop.permute.xlu0 %2053
      %v2055 = vsel %vm472, %v2048, 0
      %v2057 = vsel %vm472, %v2050, 0
      %v2059 = vsel %vm472, %v2052, 0
      %v2061 = vsel %vm472, %v2054, 0
      %2063 = vmatprep.subr.mxu0 %v196
      %2064 = vmatpush1.msra.mxu0 %v195
      %2065 = vmatprep.subr.mxu0 %v198
      %2066 = vmatpush1.msra.mxu0 %v197
      %2067 = vmatprep.subr.mxu0 0.0
      %2068 = vmatpush1.msra.mxu0 0.0
      %2069 = vmatprep.subr.mxu0 0.0
      %2070 = vmatpush1.msra.mxu0 0.0
      %2071 = vmatprep.subr.mxu0 0.0
      %2072 = vmatpush1.msra.mxu0 0.0
      %2073 = vmatprep.subr.mxu0 0.0
      %2074 = vmatpush1.msra.mxu0 0.0
      %2075 = vmatprep.subr.mxu0 0.0
      %2076 = vmatpush1.msra.mxu0 0.0
      %2077 = vmatprep.subr.mxu0 0.0
      %2078 = vmatpush1.msra.mxu0 0.0
      %2079 = vmatprep.subr.mxu0 0.0
      %2080 = vmatpush1.msra.mxu0 0.0
      %2081 = vmatprep.subr.mxu0 0.0
      %2082 = vmatpush1.msra.mxu0 0.0
      %2083 = vmatprep.subr.mxu0 0.0
      %2084 = vmatpush1.msra.mxu0 0.0
      %2085 = vmatprep.subr.mxu0 0.0
      %2086 = vmatpush1.msra.mxu0 0.0
      %2087 = vmatprep.subr.mxu0 0.0
      %2088 = vmatpush1.msra.mxu0 0.0
      %2089 = vmatprep.subr.mxu0 0.0
      %2090 = vmatpush1.msra.mxu0 0.0
      %2091 = vmatprep.subr.mxu0 0.0
      %2092 = vmatpush1.msra.mxu0 0.0
      %2093 = vmatprep.subr.mxu0 0.0
      %2094 = vmatpush1.msra.mxu0 0.0
      %2095 = vmatprep.subr.mxu0 0.0
      %2096 = vmatpush1.msra.mxu0 0.0
      %2097 = vmatprep.subr.mxu0 0.0
      %2098 = vmatpush1.msra.mxu0 0.0
      %2099 = vmatprep.subr.mxu0 0.0
      %2100 = vmatpush1.msra.mxu0 0.0
      %2101 = vmatprep.subr.mxu0 0.0
      %2102 = vmatpush1.msra.mxu0 0.0
      %2103 = vmatprep.subr.mxu0 0.0
      %2104 = vmatpush1.msra.mxu0 0.0
      %2105 = vmatprep.subr.mxu0 0.0
      %2106 = vmatpush1.msra.mxu0 0.0
      %2107 = vmatprep.subr.mxu0 0.0
      %2108 = vmatpush1.msra.mxu0 0.0
      %2109 = vmatprep.subr.mxu0 0.0
      %2110 = vmatpush1.msra.mxu0 0.0
      %2111 = vmatprep.subr.mxu0 0.0
      %2112 = vmatpush1.msra.mxu0 0.0
      %2113 = vmatprep.subr.mxu0 0.0
      %2114 = vmatpush1.msra.mxu0 0.0
      %2115 = vmatprep.subr.mxu0 0.0
      %2116 = vmatpush1.msra.mxu0 0.0
      %2117 = vmatprep.subr.mxu0 0.0
      %2118 = vmatpush1.msra.mxu0 0.0
      %2119 = vmatprep.subr.mxu0 0.0
      %2120 = vmatpush1.msra.mxu0 0.0
      %2121 = vmatprep.subr.mxu0 0.0
      %2122 = vmatpush1.msra.mxu0 0.0
      %2123 = vmatprep.subr.mxu0 0.0
      %2124 = vmatpush1.msra.mxu0 0.0
      %2125 = vmatprep.subr.mxu0 0.0
      %2126 = vmatpush1.msra.mxu0 0.0
      %2127 = vmatprep.mubr.f32.mxu0 0.0
      %2128 = vmatmul.mubr.f32.gmra.mrb[0].mxu0 %v2055
      %v2129 = vpop.f32.mrb[0].mxu0
      %v2130 = vadd.f32 0.0, %v2129
      %v2131 = vpop.f32.mrb[0].mxu0
      %v2132 = vadd.f32 0.0, %v2131
      %2133 = vmatprep.mubr.f32.mxu0 0.0
      %2134 = vmatmul.mubr.f32.gmra.mrb[0].mxu0 %v2057
      %v2135 = vpop.f32.mrb[0].mxu0
      %v2136 = vadd.f32 0.0, %v2135
      %v2137 = vpop.f32.mrb[0].mxu0
      %v2138 = vadd.f32 0.0, %v2137
      %2139 = vmatprep.mubr.f32.mxu0 0.0
      %2140 = vmatmul.mubr.f32.gmra.mrb[0].mxu0 %v2059
      %v2141 = vpop.f32.mrb[0].mxu0
      %v2142 = vadd.f32 0.0, %v2141
      %v2143 = vpop.f32.mrb[0].mxu0
      %v2144 = vadd.f32 0.0, %v2143
      %2145 = vmatprep.mubr.f32.mxu0 0.0
      %2146 = vmatmul.mubr.f32.gmra.mrb[0].mxu0 %v2061
      %v2147 = vpop.f32.mrb[0].mxu0
      %v2148 = vadd.f32 0.0, %v2147
      %v2149 = vpop.f32.mrb[0].mxu0
      %v2150 = vadd.f32 0.0, %v2149
      %2151 = vdwg.mxu0
      %2152 = vrot.lane.b32.xlu0 %v468, 16
      %v2153 = vpop.permute.xlu0 %2152
      %2154 = vrot.lane.b32.xlu0 %v469, 16
      %v2155 = vpop.permute.xlu0 %2154
      %2156 = vrot.lane.b32.xlu0 %v470, 16
      %v2157 = vpop.permute.xlu0 %2156
      %2158 = vrot.lane.b32.xlu0 %v471, 16
      %v2159 = vpop.permute.xlu0 %2158
      %v2160 = vsel %vm472, %v2153, 0
      %v2162 = vsel %vm472, %v2155, 0
      %v2164 = vsel %vm472, %v2157, 0
      %v2166 = vsel %vm472, %v2159, 0
      %2168 = vmatprep.subr.mxu0 %v200
      %2169 = vmatpush1.msra.mxu0 %v199
      %2170 = vmatprep.subr.mxu0 %v202
      %2171 = vmatpush1.msra.mxu0 %v201
      %2172 = vmatprep.subr.mxu0 0.0
      %2173 = vmatpush1.msra.mxu0 0.0
      %2174 = vmatprep.subr.mxu0 0.0
      %2175 = vmatpush1.msra.mxu0 0.0
      %2176 = vmatprep.subr.mxu0 0.0
      %2177 = vmatpush1.msra.mxu0 0.0
      %2178 = vmatprep.subr.mxu0 0.0
      %2179 = vmatpush1.msra.mxu0 0.0
      %2180 = vmatprep.subr.mxu0 0.0
      %2181 = vmatpush1.msra.mxu0 0.0
      %2182 = vmatprep.subr.mxu0 0.0
      %2183 = vmatpush1.msra.mxu0 0.0
      %2184 = vmatprep.subr.mxu0 0.0
      %2185 = vmatpush1.msra.mxu0 0.0
      %2186 = vmatprep.subr.mxu0 0.0
      %2187 = vmatpush1.msra.mxu0 0.0
      %2188 = vmatprep.subr.mxu0 0.0
      %2189 = vmatpush1.msra.mxu0 0.0
      %2190 = vmatprep.subr.mxu0 0.0
      %2191 = vmatpush1.msra.mxu0 0.0
      %2192 = vmatprep.subr.mxu0 0.0
      %2193 = vmatpush1.msra.mxu0 0.0
      %2194 = vmatprep.subr.mxu0 0.0
      %2195 = vmatpush1.msra.mxu0 0.0
      %2196 = vmatprep.subr.mxu0 0.0
      %2197 = vmatpush1.msra.mxu0 0.0
      %2198 = vmatprep.subr.mxu0 0.0
      %2199 = vmatpush1.msra.mxu0 0.0
      %2200 = vmatprep.subr.mxu0 0.0
      %2201 = vmatpush1.msra.mxu0 0.0
      %2202 = vmatprep.subr.mxu0 0.0
      %2203 = vmatpush1.msra.mxu0 0.0
      %2204 = vmatprep.subr.mxu0 0.0
      %2205 = vmatpush1.msra.mxu0 0.0
      %2206 = vmatprep.subr.mxu0 0.0
      %2207 = vmatpush1.msra.mxu0 0.0
      %2208 = vmatprep.subr.mxu0 0.0
      %2209 = vmatpush1.msra.mxu0 0.0
      %2210 = vmatprep.subr.mxu0 0.0
      %2211 = vmatpush1.msra.mxu0 0.0
      %2212 = vmatprep.subr.mxu0 0.0
      %2213 = vmatpush1.msra.mxu0 0.0
      %2214 = vmatprep.subr.mxu0 0.0
      %2215 = vmatpush1.msra.mxu0 0.0
      %2216 = vmatprep.subr.mxu0 0.0
      %2217 = vmatpush1.msra.mxu0 0.0
      %2218 = vmatprep.subr.mxu0 0.0
      %2219 = vmatpush1.msra.mxu0 0.0
      %2220 = vmatprep.subr.mxu0 0.0
      %2221 = vmatpush1.msra.mxu0 0.0
      %2222 = vmatprep.subr.mxu0 0.0
      %2223 = vmatpush1.msra.mxu0 0.0
      %2224 = vmatprep.subr.mxu0 0.0
      %2225 = vmatpush1.msra.mxu0 0.0
      %2226 = vmatprep.subr.mxu0 0.0
      %2227 = vmatpush1.msra.mxu0 0.0
      %2228 = vmatprep.subr.mxu0 0.0
      %2229 = vmatpush1.msra.mxu0 0.0
      %2230 = vmatprep.subr.mxu0 0.0
      %2231 = vmatpush1.msra.mxu0 0.0
      %2232 = vmatprep.mubr.f32.mxu0 0.0
      %2233 = vmatmul.mubr.f32.gmra.mrb[0].mxu0 %v2160
      %v2234 = vpop.f32.mrb[0].mxu0
      %v2235 = vadd.f32 0.0, %v2234
      %v2236 = vpop.f32.mrb[0].mxu0
      %v2237 = vadd.f32 0.0, %v2236
      %2238 = vmatprep.mubr.f32.mxu0 0.0
      %2239 = vmatmul.mubr.f32.gmra.mrb[0].mxu0 %v2162
      %v2240 = vpop.f32.mrb[0].mxu0
      %v2241 = vadd.f32 0.0, %v2240
      %v2242 = vpop.f32.mrb[0].mxu0
      %v2243 = vadd.f32 0.0, %v2242
      %2244 = vmatprep.mubr.f32.mxu0 0.0
      %2245 = vmatmul.mubr.f32.gmra.mrb[0].mxu0 %v2164
      %v2246 = vpop.f32.mrb[0].mxu0
      %v2247 = vadd.f32 0.0, %v2246
      %v2248 = vpop.f32.mrb[0].mxu0
      %v2249 = vadd.f32 0.0, %v2248
      %2250 = vmatprep.mubr.f32.mxu0 0.0
      %2251 = vmatmul.mubr.f32.gmra.mrb[0].mxu0 %v2166
      %v2252 = vpop.f32.mrb[0].mxu0
      %v2253 = vadd.f32 0.0, %v2252
      %v2254 = vpop.f32.mrb[0].mxu0
      %v2255 = vadd.f32 0.0, %v2254
      %2256 = vdwg.mxu0
      %v2257 = vmul.f32 %v2130, %v2235
      %v2258 = vmul.f32 %v2132, %v2237
      %v2259 = vmul.f32 %v2136, %v2241
      %v2260 = vmul.f32 %v2138, %v2243
      %v2261 = vmul.f32 %v2142, %v2247
      %v2262 = vmul.f32 %v2144, %v2249
      %v2263 = vmul.f32 %v2148, %v2253
      %v2264 = vmul.f32 %v2150, %v2255
      %v2265 = vadd.f32 %v1813, %v2257
      %v2266 = vadd.f32 %v1814, %v2258
      %v2267 = vadd.f32 %v1815, %v2259
      %v2268 = vadd.f32 %v1816, %v2260
      %v2269 = vadd.f32 %v1817, %v2261
      %v2270 = vadd.f32 %v1818, %v2262
      %v2271 = vadd.f32 %v1819, %v2263
      %v2272 = vadd.f32 %v1820, %v2264
      %v2273 = vadd.f32 %v2039, %v2265
      %v2274 = vadd.f32 %v2040, %v2266
      %v2275 = vadd.f32 %v2041, %v2267
      %v2276 = vadd.f32 %v2042, %v2268
      %v2277 = vadd.f32 %v2043, %v2269
      %v2278 = vadd.f32 %v2044, %v2270
      %v2279 = vadd.f32 %v2045, %v2271
      %v2280 = vadd.f32 %v2046, %v2272
      %s2281 = smul.addr %s209, 8
      %s2282 = scalar_lea.vmem [#allocation12], %s2281
      %2283 = vst [vmem:[%s2282] sm:$0xff] %v2273
      %2284 = vst [vmem:[%s2282 + $0x8] sm:$0xff] %v2274
      %2285 = vst [vmem:[%s2282 + $0x10] sm:$0xff] %v2275
      %2286 = vst [vmem:[%s2282 + $0x18] sm:$0xff] %v2276
      %2287 = vst [vmem:[%s2282 + $0x20] sm:$0xff] %v2277
      %2288 = vst [vmem:[%s2282 + $0x28] sm:$0xff] %v2278
      %2289 = vst [vmem:[%s2282 + $0x30] sm:$0xff] %v2279
      %2290 = vst [vmem:[%s2282 + $0x38] sm:$0xff] %v2280
    $region54: #{tpu_custom_call.1} parent=1 // loop_footer
      %s208 = sadd.s32 1, %s204
    $region55: #{tpu_custom_call.1} parent=1 // loop_footer_branch
      %203 = sbr.rel target = $region51
    $region56: #{tpu_custom_call.1} parent=1 // loop_exit
      _
    // Predicated region
    $region57: #{tpu_custom_call.1} parent=1 // pred_check
      _
    $region58: #{tpu_custom_call.1} parent=1 // pred_check_branch
      %2292 = sbr.rel (0) target = $region60
    $region59: #{tpu_custom_call.1} parent=1 // pred_region
      %s2294 = ssub.s32 2048, 2048
      %2295 = vsyncadd [#allocation5], %s2294
      %s2296 = sshll.u32 [#allocation12], 4
      %s2297 = int_to_ptr.vmem [resolvable:$true] %s2296
      %2302 = dma.vmem_to_hbm [thread:$0]  %s2297, 2048, %s7, [#allocation5], 256, 256, 16
    $region60: #{tpu_custom_call.1} parent=1 // pred_fallthru
      _
    // Predicated region
    $region61: #{tpu_custom_call.1} parent=1 // pred_check
      _
    $region62: #{tpu_custom_call.1} parent=1 // pred_check_branch
      %2304 = sbr.rel (0) target = $region64
    $region63: #{tpu_custom_call.1} parent=1 // pred_region
      %2305 = dma.done [#allocation5], 2048
    $region64: #{tpu_custom_call.1} parent=1 // pred_fallthru
      _
    %2306 = vsyncpa [#allocation4], 1
    %2307 = vsyncpa [#allocation7], 1
    %2308 = vsyncpa [#allocation10], 1
    %2309 = vsyncpa [#allocation5], 1

</llo_original>
